<compile_context>
chip_gen: v7x
topology: tpu7x:2x2x1
jax: 0.10.0
libtpu: 0.0.40
codegen_flags: <defaults>
</compile_context>

<pallas_src>
import functools

import jax
import jax.numpy as jnp
import numpy as np
from jax import lax
from jax.experimental import pallas as pl
from jax.experimental.pallas import tpu as pltpu

LANE = 128
SUBLANE = 8


def _round_up(x, m):
    return ((x + m - 1) // m) * m


# ----------------------------------------------------------------------------
# Fused Pallas kernel: the whole EIDenseNet forward for one batch tile.
# refs = (x_ref, [wex, wix, wei, b] * n_layers, o_ref); all lane-dense padded.
# ----------------------------------------------------------------------------
def fused_eidensenet_kernel(*refs, n_layers):
    x_ref = refs[0]
    o_ref = refs[-1]
    layer_refs = refs[1:-1]
    assert len(layer_refs) == 4 * n_layers

    # Contract dim 1 of lhs with dim 1 of rhs (== lhs @ rhs.T, no XLU transpose).
    dn = (((1,), (1,)), ((), ()))

    h = x_ref[...]                                      # (TB, F) f32
    for li in range(n_layers):
        wex = layer_refs[4 * li + 0][...]               # (F, F)
        wix = layer_refs[4 * li + 1][...]               # (NI, F)
        wei = layer_refs[4 * li + 2][...]               # (F, NI)
        b = layer_refs[4 * li + 3][...]                 # (1, F)

        # z = h @ Wex.T - (h @ Wix.T) @ Wei.T + b   (Dale factorization,
        # restructured to avoid materializing W_eff / the K=ni matmul on Wex).
        z_ex = lax.dot_general(h, wex, dn, preferred_element_type=jnp.float32)
        h_inh = lax.dot_general(h, wix, dn, preferred_element_type=jnp.float32)
        z_inh = lax.dot_general(h_inh, wei, dn, preferred_element_type=jnp.float32)
        z = z_ex - z_inh + b

        if li < n_layers - 1:                           # hidden layers: ReLU
            z = jnp.maximum(z, 0.0)
        h = z

    o_ref[...] = h


# ----------------------------------------------------------------------------
# Wrapper: pad to lane-dense layouts, build specs, single pallas_call.
# ----------------------------------------------------------------------------
def eidensenet_forward(x, params, num_layers=2, nonlinearity=0, batch_tile=256):
    # TODO(synk): MeanNormalize / DivisiveNormalize / LayerNormalizeCustom are
    # not defined in the provided source; only nonlinearity == NO_NORMALIZE
    # (0, the module default) is implemented here.
    assert nonlinearity == 0, "only NO_NORMALIZE (default) is implemented"

    layer_names = [f"fc{i}" for i in range(num_layers + 1)] + ["fc_output"]
    n_layers = len(layer_names)

    B, nin0 = x.shape
    out_size = params["fc_output"]["Wex"].shape[0]

    # Uniform padded feature width (multiple of 128 lanes) and inhibitory width.
    feat_dims = [nin0] + [params[n]["Wex"].shape[0] for n in layer_names]
    F = _round_up(max(feat_dims), LANE)
    NI = _round_up(max(params[n]["Wix"].shape[0] for n in layer_names), SUBLANE)

    # Batch tiling: sublane-aligned; grid axis is parallel (v7x megacore).
    TB = min(batch_tile, _round_up(B, SUBLANE))
    B_pad = _round_up(B, TB)

    xp = jnp.zeros((B_pad, F), jnp.float32).at[:B, :nin0].set(x.astype(jnp.float32))

    vmem = pltpu.MemorySpace.VMEM
    flat_inputs = [xp]
    in_specs = [pl.BlockSpec((TB, F), lambda i: (i, 0), memory_space=vmem)]

    for name in layer_names:
        p = params[name]
        nout, nin = p["Wex"].shape
        ni = p["Wix"].shape[0]
        # Zero-padding is exact: padded lanes/rows contribute 0 and ReLU(0)=0.
        wex = jnp.zeros((F, F), jnp.float32).at[:nout, :nin].set(p["Wex"])
        wix = jnp.zeros((NI, F), jnp.float32).at[:ni, :nin].set(p["Wix"])
        wei = jnp.zeros((F, NI), jnp.float32).at[:nout, :ni].set(p["Wei"])
        b = jnp.zeros((1, F), jnp.float32).at[0, :nout].set(p["b"])
        flat_inputs += [wex, wix, wei, b]
        in_specs += [
            pl.BlockSpec((F, F), lambda i: (0, 0), memory_space=vmem),
            pl.BlockSpec((NI, F), lambda i: (0, 0), memory_space=vmem),
            pl.BlockSpec((F, NI), lambda i: (0, 0), memory_space=vmem),
            pl.BlockSpec((1, F), lambda i: (0, 0), memory_space=vmem),
        ]

    kernel = functools.partial(fused_eidensenet_kernel, n_layers=n_layers)
    out_padded = pl.pallas_call(
        kernel,
        out_shape=jax.ShapeDtypeStruct((B_pad, F), jnp.float32),
        grid=(B_pad // TB,),
        in_specs=in_specs,
        out_specs=pl.BlockSpec((TB, F), lambda i: (i, 0), memory_space=vmem),
        compiler_params=pltpu.CompilerParams(
            dimension_semantics=("parallel",),
        ),
    )(*flat_inputs)

    return out_padded[:B, :out_size]


# ----------------------------------------------------------------------------
# Deterministic parameter construction (mirrors EiDenseLayer shapes)
# ----------------------------------------------------------------------------
def init_ei_layer_params(key, n_input, n_output):
    ni = max(1, int(n_output * 0.1))
    k1, k2, k3 = jax.random.split(key, 3)
    # Dale's principle: excitatory / inhibitory weights are non-negative.
    scale = 1.0 / np.sqrt(n_input)
    wex = jnp.abs(jax.random.normal(k1, (n_output, n_input), jnp.float32)) * scale
    wix = jnp.abs(jax.random.normal(k2, (ni, n_input), jnp.float32)) * scale
    wei = jnp.abs(jax.random.normal(k3, (n_output, ni), jnp.float32)) * (1.0 / max(ni, 1))
    b = jnp.zeros((n_output,), jnp.float32)
    return {"Wex": wex, "Wix": wix, "Wei": wei, "b": b}


def init_eidensenet_params(key, input_size, hidden_size, output_size, num_layers=2):
    params = {}
    keys = jax.random.split(key, num_layers + 2)
    params["fc0"] = init_ei_layer_params(keys[0], input_size, hidden_size)
    for i in range(num_layers):
        params[f"fc{i + 1}"] = init_ei_layer_params(keys[i + 1], hidden_size, hidden_size)
    params["fc_output"] = init_ei_layer_params(keys[-1], hidden_size, output_size)
    return params


# ----------------------------------------------------------------------------
# Pure-JAX reference (for an in-script sanity check)
# ----------------------------------------------------------------------------
def eidensenet_ref(x, params, num_layers=2):
    def layer(x, p, relu):
        w = p["Wex"] - p["Wei"] @ p["Wix"]
        z = x @ w.T + p["b"][None, :]
        return jnp.maximum(z, 0.0) if relu else z

    for i in range(num_layers + 1):
        x = layer(x, params[f"fc{i}"], True)
    return layer(x, params["fc_output"], False)


if __name__ == "__main__":
    batch = 8
    input_size = 32
    hidden_size = 32
    output_size = 16
    num_layers = 2

    key = jax.random.PRNGKey(0)
    k_params, k_x = jax.random.split(key)
    params = init_eidensenet_params(k_params, input_size, hidden_size, output_size,
                                    num_layers=num_layers)
    x = jax.random.normal(k_x, (batch, input_size), jnp.float32)

    fwd = jax.jit(functools.partial(eidensenet_forward,
                                    num_layers=num_layers, nonlinearity=0))
    out = fwd(x, params)
    out = jax.block_until_ready(out)

    ref = eidensenet_ref(x, params, num_layers=num_layers)
    np.testing.assert_allclose(np.asarray(out), np.asarray(ref), rtol=1e-4, atol=1e-4)
    assert out.shape == (batch, output_size)

    print("KERNEL_OK")
</pallas_src>

<mosaic_0001>
module attributes {stable_mosaic.version = 11 : i64} {
  func.func @fused_eidensenet_kernel(%arg0: i32, %arg1: memref<8x128xf32, #tpu.memory_space<vmem>>, %arg2: memref<128x128xf32, #tpu.memory_space<vmem>>, %arg3: memref<8x128xf32, #tpu.memory_space<vmem>>, %arg4: memref<128x8xf32, #tpu.memory_space<vmem>>, %arg5: memref<1x128xf32, #tpu.memory_space<vmem>>, %arg6: memref<128x128xf32, #tpu.memory_space<vmem>>, %arg7: memref<8x128xf32, #tpu.memory_space<vmem>>, %arg8: memref<128x8xf32, #tpu.memory_space<vmem>>, %arg9: memref<1x128xf32, #tpu.memory_space<vmem>>, %arg10: memref<128x128xf32, #tpu.memory_space<vmem>>, %arg11: memref<8x128xf32, #tpu.memory_space<vmem>>, %arg12: memref<128x8xf32, #tpu.memory_space<vmem>>, %arg13: memref<1x128xf32, #tpu.memory_space<vmem>>, %arg14: memref<128x128xf32, #tpu.memory_space<vmem>>, %arg15: memref<8x128xf32, #tpu.memory_space<vmem>>, %arg16: memref<128x8xf32, #tpu.memory_space<vmem>>, %arg17: memref<1x128xf32, #tpu.memory_space<vmem>>, %arg18: memref<8x128xf32, #tpu.memory_space<vmem>>) attributes {dimension_semantics = [#tpu.dimension_semantics<parallel>], iteration_bounds = array<i64: 1>, scalar_prefetch = 0 : i64, scratch_operands = 0 : i64, tpu.core_type = #tpu.core_type<tc>, window_params = [{transform_indices = @transform_0, window_bounds = array<i64: 8, 128>}, {pipeline_mode = #tpu.pipeline_mode<synchronous>, transform_indices = @transform_1, window_bounds = array<i64: 128, 128>}, {pipeline_mode = #tpu.pipeline_mode<synchronous>, transform_indices = @transform_2, window_bounds = array<i64: 8, 128>}, {pipeline_mode = #tpu.pipeline_mode<synchronous>, transform_indices = @transform_3, window_bounds = array<i64: 128, 8>}, {pipeline_mode = #tpu.pipeline_mode<synchronous>, transform_indices = @transform_4, window_bounds = array<i64: 1, 128>}, {pipeline_mode = #tpu.pipeline_mode<synchronous>, transform_indices = @transform_5, window_bounds = array<i64: 128, 128>}, {pipeline_mode = #tpu.pipeline_mode<synchronous>, transform_indices = @transform_6, window_bounds = array<i64: 8, 128>}, {pipeline_mode = #tpu.pipeline_mode<synchronous>, transform_indices = @transform_7, window_bounds = array<i64: 128, 8>}, {pipeline_mode = #tpu.pipeline_mode<synchronous>, transform_indices = @transform_8, window_bounds = array<i64: 1, 128>}, {pipeline_mode = #tpu.pipeline_mode<synchronous>, transform_indices = @transform_9, window_bounds = array<i64: 128, 128>}, {pipeline_mode = #tpu.pipeline_mode<synchronous>, transform_indices = @transform_10, window_bounds = array<i64: 8, 128>}, {pipeline_mode = #tpu.pipeline_mode<synchronous>, transform_indices = @transform_11, window_bounds = array<i64: 128, 8>}, {pipeline_mode = #tpu.pipeline_mode<synchronous>, transform_indices = @transform_12, window_bounds = array<i64: 1, 128>}, {pipeline_mode = #tpu.pipeline_mode<synchronous>, transform_indices = @transform_13, window_bounds = array<i64: 128, 128>}, {pipeline_mode = #tpu.pipeline_mode<synchronous>, transform_indices = @transform_14, window_bounds = array<i64: 8, 128>}, {pipeline_mode = #tpu.pipeline_mode<synchronous>, transform_indices = @transform_15, window_bounds = array<i64: 128, 8>}, {pipeline_mode = #tpu.pipeline_mode<synchronous>, transform_indices = @transform_16, window_bounds = array<i64: 1, 128>}, {transform_indices = @transform_17, window_bounds = array<i64: 8, 128>}]} {
    %c0 = arith.constant 0 : index
    %c0_0 = arith.constant 0 : index
    %0 = vector.load %arg1[%c0, %c0_0] : memref<8x128xf32, #tpu.memory_space<vmem>>, vector<8x128xf32>
    %c0_1 = arith.constant 0 : index
    %c0_2 = arith.constant 0 : index
    %1 = vector.load %arg2[%c0_1, %c0_2] : memref<128x128xf32, #tpu.memory_space<vmem>>, vector<128x128xf32>
    %c0_3 = arith.constant 0 : index
    %c0_4 = arith.constant 0 : index
    %2 = vector.load %arg3[%c0_3, %c0_4] : memref<8x128xf32, #tpu.memory_space<vmem>>, vector<8x128xf32>
    %c0_5 = arith.constant 0 : index
    %c0_6 = arith.constant 0 : index
    %3 = vector.load %arg4[%c0_5, %c0_6] : memref<128x8xf32, #tpu.memory_space<vmem>>, vector<128x8xf32>
    %c0_7 = arith.constant 0 : index
    %c0_8 = arith.constant 0 : index
    %4 = vector.load %arg5[%c0_7, %c0_8] : memref<1x128xf32, #tpu.memory_space<vmem>>, vector<1x128xf32>
    %cst = arith.constant dense<0.000000e+00> : vector<8x128xf32>
    %5 = tpu.matmul %0, %1, %cst {dimension_numbers = #tpu.dot_dimension_numbers<[1], [1], [0], [0], [0, 0, 1, 0], [], []>} : vector<8x128xf32>, vector<128x128xf32>, vector<8x128xf32> -> vector<8x128xf32>
    %cst_9 = arith.constant dense<0.000000e+00> : vector<8x8xf32>
    %6 = tpu.matmul %0, %2, %cst_9 {dimension_numbers = #tpu.dot_dimension_numbers<[1], [1], [0], [0], [0, 0, 1, 0], [], []>} : vector<8x128xf32>, vector<8x128xf32>, vector<8x8xf32> -> vector<8x8xf32>
    %cst_10 = arith.constant dense<0.000000e+00> : vector<8x128xf32>
    %7 = tpu.matmul %6, %3, %cst_10 {dimension_numbers = #tpu.dot_dimension_numbers<[1], [1], [0], [0], [0, 0, 1, 0], [], []>} : vector<8x8xf32>, vector<128x8xf32>, vector<8x128xf32> -> vector<8x128xf32>
    %8 = arith.subf %5, %7 : vector<8x128xf32>
    %9 = vector.broadcast %4 : vector<1x128xf32> to vector<8x128xf32>
    %10 = arith.addf %8, %9 : vector<8x128xf32>
    %cst_11 = arith.constant 0.000000e+00 : f32
    %11 = vector.broadcast %cst_11 : f32 to vector<8x128xf32>
    %12 = arith.maximumf %10, %11 : vector<8x128xf32>
    %c0_12 = arith.constant 0 : index
    %c0_13 = arith.constant 0 : index
    %13 = vector.load %arg6[%c0_12, %c0_13] : memref<128x128xf32, #tpu.memory_space<vmem>>, vector<128x128xf32>
    %c0_14 = arith.constant 0 : index
    %c0_15 = arith.constant 0 : index
    %14 = vector.load %arg7[%c0_14, %c0_15] : memref<8x128xf32, #tpu.memory_space<vmem>>, vector<8x128xf32>
    %c0_16 = arith.constant 0 : index
    %c0_17 = arith.constant 0 : index
    %15 = vector.load %arg8[%c0_16, %c0_17] : memref<128x8xf32, #tpu.memory_space<vmem>>, vector<128x8xf32>
    %c0_18 = arith.constant 0 : index
    %c0_19 = arith.constant 0 : index
    %16 = vector.load %arg9[%c0_18, %c0_19] : memref<1x128xf32, #tpu.memory_space<vmem>>, vector<1x128xf32>
    %cst_20 = arith.constant dense<0.000000e+00> : vector<8x128xf32>
    %17 = tpu.matmul %12, %13, %cst_20 {dimension_numbers = #tpu.dot_dimension_numbers<[1], [1], [0], [0], [0, 0, 1, 0], [], []>} : vector<8x128xf32>, vector<128x128xf32>, vector<8x128xf32> -> vector<8x128xf32>
    %cst_21 = arith.constant dense<0.000000e+00> : vector<8x8xf32>
    %18 = tpu.matmul %12, %14, %cst_21 {dimension_numbers = #tpu.dot_dimension_numbers<[1], [1], [0], [0], [0, 0, 1, 0], [], []>} : vector<8x128xf32>, vector<8x128xf32>, vector<8x8xf32> -> vector<8x8xf32>
    %cst_22 = arith.constant dense<0.000000e+00> : vector<8x128xf32>
    %19 = tpu.matmul %18, %15, %cst_22 {dimension_numbers = #tpu.dot_dimension_numbers<[1], [1], [0], [0], [0, 0, 1, 0], [], []>} : vector<8x8xf32>, vector<128x8xf32>, vector<8x128xf32> -> vector<8x128xf32>
    %20 = arith.subf %17, %19 : vector<8x128xf32>
    %21 = vector.broadcast %16 : vector<1x128xf32> to vector<8x128xf32>
    %22 = arith.addf %20, %21 : vector<8x128xf32>
    %cst_23 = arith.constant 0.000000e+00 : f32
    %23 = vector.broadcast %cst_23 : f32 to vector<8x128xf32>
    %24 = arith.maximumf %22, %23 : vector<8x128xf32>
    %c0_24 = arith.constant 0 : index
    %c0_25 = arith.constant 0 : index
    %25 = vector.load %arg10[%c0_24, %c0_25] : memref<128x128xf32, #tpu.memory_space<vmem>>, vector<128x128xf32>
    %c0_26 = arith.constant 0 : index
    %c0_27 = arith.constant 0 : index
    %26 = vector.load %arg11[%c0_26, %c0_27] : memref<8x128xf32, #tpu.memory_space<vmem>>, vector<8x128xf32>
    %c0_28 = arith.constant 0 : index
    %c0_29 = arith.constant 0 : index
    %27 = vector.load %arg12[%c0_28, %c0_29] : memref<128x8xf32, #tpu.memory_space<vmem>>, vector<128x8xf32>
    %c0_30 = arith.constant 0 : index
    %c0_31 = arith.constant 0 : index
    %28 = vector.load %arg13[%c0_30, %c0_31] : memref<1x128xf32, #tpu.memory_space<vmem>>, vector<1x128xf32>
    %cst_32 = arith.constant dense<0.000000e+00> : vector<8x128xf32>
    %29 = tpu.matmul %24, %25, %cst_32 {dimension_numbers = #tpu.dot_dimension_numbers<[1], [1], [0], [0], [0, 0, 1, 0], [], []>} : vector<8x128xf32>, vector<128x128xf32>, vector<8x128xf32> -> vector<8x128xf32>
    %cst_33 = arith.constant dense<0.000000e+00> : vector<8x8xf32>
    %30 = tpu.matmul %24, %26, %cst_33 {dimension_numbers = #tpu.dot_dimension_numbers<[1], [1], [0], [0], [0, 0, 1, 0], [], []>} : vector<8x128xf32>, vector<8x128xf32>, vector<8x8xf32> -> vector<8x8xf32>
    %cst_34 = arith.constant dense<0.000000e+00> : vector<8x128xf32>
    %31 = tpu.matmul %30, %27, %cst_34 {dimension_numbers = #tpu.dot_dimension_numbers<[1], [1], [0], [0], [0, 0, 1, 0], [], []>} : vector<8x8xf32>, vector<128x8xf32>, vector<8x128xf32> -> vector<8x128xf32>
    %32 = arith.subf %29, %31 : vector<8x128xf32>
    %33 = vector.broadcast %28 : vector<1x128xf32> to vector<8x128xf32>
    %34 = arith.addf %32, %33 : vector<8x128xf32>
    %cst_35 = arith.constant 0.000000e+00 : f32
    %35 = vector.broadcast %cst_35 : f32 to vector<8x128xf32>
    %36 = arith.maximumf %34, %35 : vector<8x128xf32>
    %c0_36 = arith.constant 0 : index
    %c0_37 = arith.constant 0 : index
    %37 = vector.load %arg14[%c0_36, %c0_37] : memref<128x128xf32, #tpu.memory_space<vmem>>, vector<128x128xf32>
    %c0_38 = arith.constant 0 : index
    %c0_39 = arith.constant 0 : index
    %38 = vector.load %arg15[%c0_38, %c0_39] : memref<8x128xf32, #tpu.memory_space<vmem>>, vector<8x128xf32>
    %c0_40 = arith.constant 0 : index
    %c0_41 = arith.constant 0 : index
    %39 = vector.load %arg16[%c0_40, %c0_41] : memref<128x8xf32, #tpu.memory_space<vmem>>, vector<128x8xf32>
    %c0_42 = arith.constant 0 : index
    %c0_43 = arith.constant 0 : index
    %40 = vector.load %arg17[%c0_42, %c0_43] : memref<1x128xf32, #tpu.memory_space<vmem>>, vector<1x128xf32>
    %cst_44 = arith.constant dense<0.000000e+00> : vector<8x128xf32>
    %41 = tpu.matmul %36, %37, %cst_44 {dimension_numbers = #tpu.dot_dimension_numbers<[1], [1], [0], [0], [0, 0, 1, 0], [], []>} : vector<8x128xf32>, vector<128x128xf32>, vector<8x128xf32> -> vector<8x128xf32>
    %cst_45 = arith.constant dense<0.000000e+00> : vector<8x8xf32>
    %42 = tpu.matmul %36, %38, %cst_45 {dimension_numbers = #tpu.dot_dimension_numbers<[1], [1], [0], [0], [0, 0, 1, 0], [], []>} : vector<8x128xf32>, vector<8x128xf32>, vector<8x8xf32> -> vector<8x8xf32>
    %cst_46 = arith.constant dense<0.000000e+00> : vector<8x128xf32>
    %43 = tpu.matmul %42, %39, %cst_46 {dimension_numbers = #tpu.dot_dimension_numbers<[1], [1], [0], [0], [0, 0, 1, 0], [], []>} : vector<8x8xf32>, vector<128x8xf32>, vector<8x128xf32> -> vector<8x128xf32>
    %44 = arith.subf %41, %43 : vector<8x128xf32>
    %45 = vector.broadcast %40 : vector<1x128xf32> to vector<8x128xf32>
    %46 = arith.addf %44, %45 : vector<8x128xf32>
    %c0_47 = arith.constant 0 : index
    %c0_48 = arith.constant 0 : index
    %47 = vector.load %arg18[%c0_47, %c0_48] : memref<8x128xf32, #tpu.memory_space<vmem>>, vector<8x128xf32>
    tpu.vector_store %arg18[%c0_47, %c0_48], %46 {strides = array<i32>} : memref<8x128xf32, #tpu.memory_space<vmem>>, vector<8x128xf32>,
    return
  }
  func.func @transform_0(%arg0: i32) -> (i32, i32) {
    %c0_i32 = arith.constant 0 : i32
    %c0_i32_0 = arith.constant 0 : i32
    return %arg0, %c0_i32 : i32, i32
  }
  func.func @transform_1(%arg0: i32) -> (i32, i32) {
    %c0_i32 = arith.constant 0 : i32
    %c0_i32_0 = arith.constant 0 : i32
    %c0_i32_1 = arith.constant 0 : i32
    return %c0_i32, %c0_i32_0 : i32, i32
  }
  func.func @transform_2(%arg0: i32) -> (i32, i32) {
    %c0_i32 = arith.constant 0 : i32
    %c0_i32_0 = arith.constant 0 : i32
    %c0_i32_1 = arith.constant 0 : i32
    return %c0_i32, %c0_i32_0 : i32, i32
  }
  func.func @transform_3(%arg0: i32) -> (i32, i32) {
    %c0_i32 = arith.constant 0 : i32
    %c0_i32_0 = arith.constant 0 : i32
    %c0_i32_1 = arith.constant 0 : i32
    return %c0_i32, %c0_i32_0 : i32, i32
  }
  func.func @transform_4(%arg0: i32) -> (i32, i32) {
    %c0_i32 = arith.constant 0 : i32
    %c0_i32_0 = arith.constant 0 : i32
    %c0_i32_1 = arith.constant 0 : i32
    return %c0_i32, %c0_i32_0 : i32, i32
  }
  func.func @transform_5(%arg0: i32) -> (i32, i32) {
    %c0_i32 = arith.constant 0 : i32
    %c0_i32_0 = arith.constant 0 : i32
    %c0_i32_1 = arith.constant 0 : i32
    return %c0_i32, %c0_i32_0 : i32, i32
  }
  func.func @transform_6(%arg0: i32) -> (i32, i32) {
    %c0_i32 = arith.constant 0 : i32
    %c0_i32_0 = arith.constant 0 : i32
    %c0_i32_1 = arith.constant 0 : i32
    return %c0_i32, %c0_i32_0 : i32, i32
  }
  func.func @transform_7(%arg0: i32) -> (i32, i32) {
    %c0_i32 = arith.constant 0 : i32
    %c0_i32_0 = arith.constant 0 : i32
    %c0_i32_1 = arith.constant 0 : i32
    return %c0_i32, %c0_i32_0 : i32, i32
  }
  func.func @transform_8(%arg0: i32) -> (i32, i32) {
    %c0_i32 = arith.constant 0 : i32
    %c0_i32_0 = arith.constant 0 : i32
    %c0_i32_1 = arith.constant 0 : i32
    return %c0_i32, %c0_i32_0 : i32, i32
  }
  func.func @transform_9(%arg0: i32) -> (i32, i32) {
    %c0_i32 = arith.constant 0 : i32
    %c0_i32_0 = arith.constant 0 : i32
    %c0_i32_1 = arith.constant 0 : i32
    return %c0_i32, %c0_i32_0 : i32, i32
  }
  func.func @transform_10(%arg0: i32) -> (i32, i32) {
    %c0_i32 = arith.constant 0 : i32
    %c0_i32_0 = arith.constant 0 : i32
    %c0_i32_1 = arith.constant 0 : i32
    return %c0_i32, %c0_i32_0 : i32, i32
  }
  func.func @transform_11(%arg0: i32) -> (i32, i32) {
    %c0_i32 = arith.constant 0 : i32
    %c0_i32_0 = arith.constant 0 : i32
    %c0_i32_1 = arith.constant 0 : i32
    return %c0_i32, %c0_i32_0 : i32, i32
  }
  func.func @transform_12(%arg0: i32) -> (i32, i32) {
    %c0_i32 = arith.constant 0 : i32
    %c0_i32_0 = arith.constant 0 : i32
    %c0_i32_1 = arith.constant 0 : i32
    return %c0_i32, %c0_i32_0 : i32, i32
  }
  func.func @transform_13(%arg0: i32) -> (i32, i32) {
    %c0_i32 = arith.constant 0 : i32
    %c0_i32_0 = arith.constant 0 : i32
    %c0_i32_1 = arith.constant 0 : i32
    return %c0_i32, %c0_i32_0 : i32, i32
  }
  func.func @transform_14(%arg0: i32) -> (i32, i32) {
    %c0_i32 = arith.constant 0 : i32
    %c0_i32_0 = arith.constant 0 : i32
    %c0_i32_1 = arith.constant 0 : i32
    return %c0_i32, %c0_i32_0 : i32, i32
  }
  func.func @transform_15(%arg0: i32) -> (i32, i32) {
    %c0_i32 = arith.constant 0 : i32
    %c0_i32_0 = arith.constant 0 : i32
    %c0_i32_1 = arith.constant 0 : i32
    return %c0_i32, %c0_i32_0 : i32, i32
  }
  func.func @transform_16(%arg0: i32) -> (i32, i32) {
    %c0_i32 = arith.constant 0 : i32
    %c0_i32_0 = arith.constant 0 : i32
    %c0_i32_1 = arith.constant 0 : i32
    return %c0_i32, %c0_i32_0 : i32, i32
  }
  func.func @transform_17(%arg0: i32) -> (i32, i32) {
    %c0_i32 = arith.constant 0 : i32
    %c0_i32_0 = arith.constant 0 : i32
    return %arg0, %c0_i32 : i32, i32
  }
}

</mosaic_0001>

<llo_original>
// kernel: eidensenet_forward.1
$region0: #{eidensenet_forward.1}
  #allocation0 [shape = 'u32[]', space=smem, size = 0x4, offset = 0x4, fixed_abs, tag = 'smem constant byte address 0x4 - core index']
  #allocation1 [shape = 'u32[144,128]{1,0:T(1,128)}', space=vmem, size = 0x12000, scoped, tag = 'internal scratch']
  %s0 = inlined_call_operand.vmem [shape: f32[8,128], index: 0, kind: input, shape index: {}]
  %s1 = inlined_call_operand.vmem [shape: f32[128,128], index: 1, kind: input, shape index: {}]
  %s2 = inlined_call_operand.vmem [shape: f32[8,128], index: 2, kind: input, shape index: {}]
  %s3 = inlined_call_operand.vmem [shape: f32[128,8], index: 3, kind: input, shape index: {}]
  %s4 = inlined_call_operand.vmem [shape: f32[1,128], index: 4, kind: input, shape index: {}]
  %s5 = inlined_call_operand.vmem [shape: f32[128,128], index: 5, kind: input, shape index: {}]
  %s6 = inlined_call_operand.vmem [shape: f32[8,128], index: 6, kind: input, shape index: {}]
  %s7 = inlined_call_operand.vmem [shape: f32[128,8], index: 7, kind: input, shape index: {}]
  %s8 = inlined_call_operand.vmem [shape: f32[1,128], index: 8, kind: input, shape index: {}]
  %s9 = inlined_call_operand.vmem [shape: f32[128,128], index: 9, kind: input, shape index: {}]
  %s10 = inlined_call_operand.vmem [shape: f32[8,128], index: 10, kind: input, shape index: {}]
  %s11 = inlined_call_operand.vmem [shape: f32[128,8], index: 11, kind: input, shape index: {}]
  %s12 = inlined_call_operand.vmem [shape: f32[1,128], index: 12, kind: input, shape index: {}]
  %s13 = inlined_call_operand.vmem [shape: f32[128,128], index: 13, kind: input, shape index: {}]
  %s14 = inlined_call_operand.vmem [shape: f32[8,128], index: 14, kind: input, shape index: {}]
  %s15 = inlined_call_operand.vmem [shape: f32[128,8], index: 15, kind: input, shape index: {}]
  %s16 = inlined_call_operand.vmem [shape: f32[1,128], index: 16, kind: input, shape index: {}]
  %s17 = inlined_call_operand.hbm [shape: f32[8,128], index: 17, kind: output, shape index: {}]
  %s18 = sld [smem:[#allocation0]]
  $region78: #{eidensenet_forward.1} parent=0
    _
  %s20 = ssub.s32 1, %s18
  %s21 = scalar_select 0, %s20, %s18
  $region1: #{eidensenet_forward.1} parent=0
    #allocation2 [shape = 'u8[4096]{0}', space=vmem, size = 0x1000, scoped, tag = 'output window, operand 0, single buffered']
    #allocation3 [shape = 's32[1]{0}', space=sflag, size = 0x4, scoped, tag = 'scoped memory for eidensenet_forward.1']
    %22 = vsyncpa [#allocation3], 0
    // Predicated region
    $region2: #{eidensenet_forward.1} parent=1 // pred_check
      _
    $region3: #{eidensenet_forward.1} parent=1 // pred_check_branch
      %24 = sbr.rel (0) target = $region5
    $region4: #{eidensenet_forward.1} parent=1 // pred_region
      _
    $region5: #{eidensenet_forward.1} parent=1 // pred_fallthru
      _
    // Predicated region
    $region6: #{eidensenet_forward.1} parent=1 // pred_check
      _
    $region7: #{eidensenet_forward.1} parent=1 // pred_check_branch
      %26 = sbr.rel (0) target = $region9
    $region8: #{eidensenet_forward.1} parent=1 // pred_region
      _
    $region9: #{eidensenet_forward.1} parent=1 // pred_fallthru
      _
    // Predicated region
    $region10: #{eidensenet_forward.1} parent=1 // pred_check
      _
    $region11: #{eidensenet_forward.1} parent=1 // pred_check_branch
      %28 = sbr.rel (0) target = $region13
    $region12: #{eidensenet_forward.1} parent=1 // pred_region
      _
    $region13: #{eidensenet_forward.1} parent=1 // pred_fallthru
      _
    // Predicated region
    $region14: #{eidensenet_forward.1} parent=1 // pred_check
      _
    $region15: #{eidensenet_forward.1} parent=1 // pred_check_branch
      %30 = sbr.rel (0) target = $region17
    $region16: #{eidensenet_forward.1} parent=1 // pred_region
      _
    $region17: #{eidensenet_forward.1} parent=1 // pred_fallthru
      _
    // Predicated region
    $region18: #{eidensenet_forward.1} parent=1 // pred_check
      _
    $region19: #{eidensenet_forward.1} parent=1 // pred_check_branch
      %32 = sbr.rel (0) target = $region21
    $region20: #{eidensenet_forward.1} parent=1 // pred_region
      _
    $region21: #{eidensenet_forward.1} parent=1 // pred_fallthru
      _
    // Predicated region
    $region22: #{eidensenet_forward.1} parent=1 // pred_check
      _
    $region23: #{eidensenet_forward.1} parent=1 // pred_check_branch
      %34 = sbr.rel (0) target = $region25
    $region24: #{eidensenet_forward.1} parent=1 // pred_region
      _
    $region25: #{eidensenet_forward.1} parent=1 // pred_fallthru
      _
    // Predicated region
    $region26: #{eidensenet_forward.1} parent=1 // pred_check
      _
    $region27: #{eidensenet_forward.1} parent=1 // pred_check_branch
      %36 = sbr.rel (0) target = $region29
    $region28: #{eidensenet_forward.1} parent=1 // pred_region
      _
    $region29: #{eidensenet_forward.1} parent=1 // pred_fallthru
      _
    // Predicated region
    $region30: #{eidensenet_forward.1} parent=1 // pred_check
      _
    $region31: #{eidensenet_forward.1} parent=1 // pred_check_branch
      %38 = sbr.rel (0) target = $region33
    $region32: #{eidensenet_forward.1} parent=1 // pred_region
      _
    $region33: #{eidensenet_forward.1} parent=1 // pred_fallthru
      _
    // Predicated region
    $region34: #{eidensenet_forward.1} parent=1 // pred_check
      _
    $region35: #{eidensenet_forward.1} parent=1 // pred_check_branch
      %40 = sbr.rel (0) target = $region37
    $region36: #{eidensenet_forward.1} parent=1 // pred_region
      _
    $region37: #{eidensenet_forward.1} parent=1 // pred_fallthru
      _
    // Predicated region
    $region38: #{eidensenet_forward.1} parent=1 // pred_check
      _
    $region39: #{eidensenet_forward.1} parent=1 // pred_check_branch
      %42 = sbr.rel (0) target = $region41
    $region40: #{eidensenet_forward.1} parent=1 // pred_region
      _
    $region41: #{eidensenet_forward.1} parent=1 // pred_fallthru
      _
    // Predicated region
    $region42: #{eidensenet_forward.1} parent=1 // pred_check
      _
    $region43: #{eidensenet_forward.1} parent=1 // pred_check_branch
      %44 = sbr.rel (0) target = $region45
    $region44: #{eidensenet_forward.1} parent=1 // pred_region
      _
    $region45: #{eidensenet_forward.1} parent=1 // pred_fallthru
      _
    // Predicated region
    $region46: #{eidensenet_forward.1} parent=1 // pred_check
      _
    $region47: #{eidensenet_forward.1} parent=1 // pred_check_branch
      %46 = sbr.rel (0) target = $region49
    $region48: #{eidensenet_forward.1} parent=1 // pred_region
      _
    $region49: #{eidensenet_forward.1} parent=1 // pred_fallthru
      _
    // Predicated region
    $region50: #{eidensenet_forward.1} parent=1 // pred_check
      _
    $region51: #{eidensenet_forward.1} parent=1 // pred_check_branch
      %48 = sbr.rel (0) target = $region53
    $region52: #{eidensenet_forward.1} parent=1 // pred_region
      _
    $region53: #{eidensenet_forward.1} parent=1 // pred_fallthru
      _
    // Predicated region
    $region54: #{eidensenet_forward.1} parent=1 // pred_check
      _
    $region55: #{eidensenet_forward.1} parent=1 // pred_check_branch
      %50 = sbr.rel (0) target = $region57
    $region56: #{eidensenet_forward.1} parent=1 // pred_region
      _
    $region57: #{eidensenet_forward.1} parent=1 // pred_fallthru
      _
    // Predicated region
    $region58: #{eidensenet_forward.1} parent=1 // pred_check
      _
    $region59: #{eidensenet_forward.1} parent=1 // pred_check_branch
      %52 = sbr.rel (0) target = $region61
    $region60: #{eidensenet_forward.1} parent=1 // pred_region
      _
    $region61: #{eidensenet_forward.1} parent=1 // pred_fallthru
      _
    // Predicated region
    $region62: #{eidensenet_forward.1} parent=1 // pred_check
      _
    $region63: #{eidensenet_forward.1} parent=1 // pred_check_branch
      %54 = sbr.rel (0) target = $region65
    $region64: #{eidensenet_forward.1} parent=1 // pred_region
      _
    $region65: #{eidensenet_forward.1} parent=1 // pred_fallthru
      _
    // Predicated region
    $region66: #{eidensenet_forward.1} parent=1 // pred_check
      _
    $region67: #{eidensenet_forward.1} parent=1 // pred_check_branch
      %56 = sbr.rel (0) target = $region69
    $region68: #{eidensenet_forward.1} parent=1 // pred_region
      _
    $region69: #{eidensenet_forward.1} parent=1 // pred_fallthru
      _
    %v57 = vld [vmem:[%s0] sm:$0xff]
    %v58 = vld [vmem:[%s1] sm:$0xff]
    %v59 = vld [vmem:[%s1 + $0x8] sm:$0xff]
    %v60 = vld [vmem:[%s1 + $0x10] sm:$0xff]
    %v61 = vld [vmem:[%s1 + $0x18] sm:$0xff]
    %v62 = vld [vmem:[%s1 + $0x20] sm:$0xff]
    %v63 = vld [vmem:[%s1 + $0x28] sm:$0xff]
    %v64 = vld [vmem:[%s1 + $0x30] sm:$0xff]
    %v65 = vld [vmem:[%s1 + $0x38] sm:$0xff]
    %v66 = vld [vmem:[%s1 + $0x40] sm:$0xff]
    %v67 = vld [vmem:[%s1 + $0x48] sm:$0xff]
    %v68 = vld [vmem:[%s1 + $0x50] sm:$0xff]
    %v69 = vld [vmem:[%s1 + $0x58] sm:$0xff]
    %v70 = vld [vmem:[%s1 + $0x60] sm:$0xff]
    %v71 = vld [vmem:[%s1 + $0x68] sm:$0xff]
    %v72 = vld [vmem:[%s1 + $0x70] sm:$0xff]
    %v73 = vld [vmem:[%s1 + $0x78] sm:$0xff]
    %v74 = vld [vmem:[%s2] sm:$0xff]
    %v75 = vld [vmem:[%s3] sm:$0xff]
    %v76 = vld [vmem:[%s3 + $0x8] sm:$0xff]
    %v77 = vld [vmem:[%s3 + $0x10] sm:$0xff]
    %v78 = vld [vmem:[%s3 + $0x18] sm:$0xff]
    %v79 = vld [vmem:[%s3 + $0x20] sm:$0xff]
    %v80 = vld [vmem:[%s3 + $0x28] sm:$0xff]
    %v81 = vld [vmem:[%s3 + $0x30] sm:$0xff]
    %v82 = vld [vmem:[%s3 + $0x38] sm:$0xff]
    %v83 = vld [vmem:[%s3 + $0x40] sm:$0xff]
    %v84 = vld [vmem:[%s3 + $0x48] sm:$0xff]
    %v85 = vld [vmem:[%s3 + $0x50] sm:$0xff]
    %v86 = vld [vmem:[%s3 + $0x58] sm:$0xff]
    %v87 = vld [vmem:[%s3 + $0x60] sm:$0xff]
    %v88 = vld [vmem:[%s3 + $0x68] sm:$0xff]
    %v89 = vld [vmem:[%s3 + $0x70] sm:$0xff]
    %v90 = vld [vmem:[%s3 + $0x78] sm:$0xff]
    %v91 = vld [vmem:[%s4] sm:$0x1]
    %92 = vmatprep.subr.mxu0 0.0
    %93 = vmatpush1.xpose.msra.mxu0 %v58
    %94 = vmatprep.subr.mxu0 0.0
    %95 = vmatpush1.xpose.msra.mxu0 %v59
    %96 = vmatprep.subr.mxu0 0.0
    %97 = vmatpush1.xpose.msra.mxu0 %v60
    %98 = vmatprep.subr.mxu0 0.0
    %99 = vmatpush1.xpose.msra.mxu0 %v61
    %100 = vmatprep.subr.mxu0 0.0
    %101 = vmatpush1.xpose.msra.mxu0 %v62
    %102 = vmatprep.subr.mxu0 0.0
    %103 = vmatpush1.xpose.msra.mxu0 %v63
    %104 = vmatprep.subr.mxu0 0.0
    %105 = vmatpush1.xpose.msra.mxu0 %v64
    %106 = vmatprep.subr.mxu0 0.0
    %107 = vmatpush1.xpose.msra.mxu0 %v65
    %108 = vmatprep.subr.mxu0 0.0
    %109 = vmatpush1.xpose.msra.mxu0 %v66
    %110 = vmatprep.subr.mxu0 0.0
    %111 = vmatpush1.xpose.msra.mxu0 %v67
    %112 = vmatprep.subr.mxu0 0.0
    %113 = vmatpush1.xpose.msra.mxu0 %v68
    %114 = vmatprep.subr.mxu0 0.0
    %115 = vmatpush1.xpose.msra.mxu0 %v69
    %116 = vmatprep.subr.mxu0 0.0
    %117 = vmatpush1.xpose.msra.mxu0 %v70
    %118 = vmatprep.subr.mxu0 0.0
    %119 = vmatpush1.xpose.msra.mxu0 %v71
    %120 = vmatprep.subr.mxu0 0.0
    %121 = vmatpush1.xpose.msra.mxu0 %v72
    %122 = vmatprep.subr.mxu0 0.0
    %123 = vmatpush1.xpose.msra.mxu0 %v73
    %124 = vmatprep.subr.mxu0 0.0
    %125 = vmatpush1.xpose.msra.mxu0 0.0
    %126 = vmatprep.subr.mxu0 0.0
    %127 = vmatpush1.xpose.msra.mxu0 0.0
    %128 = vmatprep.subr.mxu0 0.0
    %129 = vmatpush1.xpose.msra.mxu0 0.0
    %130 = vmatprep.subr.mxu0 0.0
    %131 = vmatpush1.xpose.msra.mxu0 0.0
    %132 = vmatprep.subr.mxu0 0.0
    %133 = vmatpush1.xpose.msra.mxu0 0.0
    %134 = vmatprep.subr.mxu0 0.0
    %135 = vmatpush1.xpose.msra.mxu0 0.0
    %136 = vmatprep.subr.mxu0 0.0
    %137 = vmatpush1.xpose.msra.mxu0 0.0
    %138 = vmatprep.subr.mxu0 0.0
    %139 = vmatpush1.xpose.msra.mxu0 0.0
    %140 = vmatprep.subr.mxu0 0.0
    %141 = vmatpush1.xpose.msra.mxu0 0.0
    %142 = vmatprep.subr.mxu0 0.0
    %143 = vmatpush1.xpose.msra.mxu0 0.0
    %144 = vmatprep.subr.mxu0 0.0
    %145 = vmatpush1.xpose.msra.mxu0 0.0
    %146 = vmatprep.subr.mxu0 0.0
    %147 = vmatpush1.xpose.msra.mxu0 0.0
    %148 = vmatprep.subr.mxu0 0.0
    %149 = vmatpush1.xpose.msra.mxu0 0.0
    %150 = vmatprep.subr.mxu0 0.0
    %151 = vmatpush1.xpose.msra.mxu0 0.0
    %152 = vmatprep.subr.mxu0 0.0
    %153 = vmatpush1.xpose.msra.mxu0 0.0
    %154 = vmatprep.subr.mxu0 0.0
    %155 = vmatpush1.xpose.msra.mxu0 0.0
    %156 = vmatprep.mubr.f32.mxu0 0.0
    %157 = vmatmul.mubr.f32.gmra.mrb[0].mxu0 %v57
    %v158 = vpop.f32.mrb[0].mxu0
    %v159 = vadd.f32 0.0, %v158
    %v160 = vpop.f32.mrb[0].mxu0
    %161 = vdwg.mxu0
    %162 = vmatprep.subr.mxu0 0.0
    %163 = vmatpush1.xpose.msra.mxu0 %v74
    %164 = vmatprep.subr.mxu0 0.0
    %165 = vmatpush1.xpose.msra.mxu0 0.0
    %166 = vmatprep.subr.mxu0 0.0
    %167 = vmatpush1.xpose.msra.mxu0 0.0
    %168 = vmatprep.subr.mxu0 0.0
    %169 = vmatpush1.xpose.msra.mxu0 0.0
    %170 = vmatprep.subr.mxu0 0.0
    %171 = vmatpush1.xpose.msra.mxu0 0.0
    %172 = vmatprep.subr.mxu0 0.0
    %173 = vmatpush1.xpose.msra.mxu0 0.0
    %174 = vmatprep.subr.mxu0 0.0
    %175 = vmatpush1.xpose.msra.mxu0 0.0
    %176 = vmatprep.subr.mxu0 0.0
    %177 = vmatpush1.xpose.msra.mxu0 0.0
    %178 = vmatprep.subr.mxu0 0.0
    %179 = vmatpush1.xpose.msra.mxu0 0.0
    %180 = vmatprep.subr.mxu0 0.0
    %181 = vmatpush1.xpose.msra.mxu0 0.0
    %182 = vmatprep.subr.mxu0 0.0
    %183 = vmatpush1.xpose.msra.mxu0 0.0
    %184 = vmatprep.subr.mxu0 0.0
    %185 = vmatpush1.xpose.msra.mxu0 0.0
    %186 = vmatprep.subr.mxu0 0.0
    %187 = vmatpush1.xpose.msra.mxu0 0.0
    %188 = vmatprep.subr.mxu0 0.0
    %189 = vmatpush1.xpose.msra.mxu0 0.0
    %190 = vmatprep.subr.mxu0 0.0
    %191 = vmatpush1.xpose.msra.mxu0 0.0
    %192 = vmatprep.subr.mxu0 0.0
    %193 = vmatpush1.xpose.msra.mxu0 0.0
    %194 = vmatprep.subr.mxu0 0.0
    %195 = vmatpush1.xpose.msra.mxu0 0.0
    %196 = vmatprep.subr.mxu0 0.0
    %197 = vmatpush1.xpose.msra.mxu0 0.0
    %198 = vmatprep.subr.mxu0 0.0
    %199 = vmatpush1.xpose.msra.mxu0 0.0
    %200 = vmatprep.subr.mxu0 0.0
    %201 = vmatpush1.xpose.msra.mxu0 0.0
    %202 = vmatprep.subr.mxu0 0.0
    %203 = vmatpush1.xpose.msra.mxu0 0.0
    %204 = vmatprep.subr.mxu0 0.0
    %205 = vmatpush1.xpose.msra.mxu0 0.0
    %206 = vmatprep.subr.mxu0 0.0
    %207 = vmatpush1.xpose.msra.mxu0 0.0
    %208 = vmatprep.subr.mxu0 0.0
    %209 = vmatpush1.xpose.msra.mxu0 0.0
    %210 = vmatprep.subr.mxu0 0.0
    %211 = vmatpush1.xpose.msra.mxu0 0.0
    %212 = vmatprep.subr.mxu0 0.0
    %213 = vmatpush1.xpose.msra.mxu0 0.0
    %214 = vmatprep.subr.mxu0 0.0
    %215 = vmatpush1.xpose.msra.mxu0 0.0
    %216 = vmatprep.subr.mxu0 0.0
    %217 = vmatpush1.xpose.msra.mxu0 0.0
    %218 = vmatprep.subr.mxu0 0.0
    %219 = vmatpush1.xpose.msra.mxu0 0.0
    %220 = vmatprep.subr.mxu0 0.0
    %221 = vmatpush1.xpose.msra.mxu0 0.0
    %222 = vmatprep.subr.mxu0 0.0
    %223 = vmatpush1.xpose.msra.mxu0 0.0
    %224 = vmatprep.subr.mxu0 0.0
    %225 = vmatpush1.xpose.msra.mxu0 0.0
    %226 = vmatprep.mubr.f32.mxu0 0.0
    %227 = vmatmul.mubr.f32.gmra.mrb[0].mxu0 %v57
    %v228 = vpop.f32.mrb[0].mxu0
    %v229 = vadd.f32 0.0, %v228
    %v230 = vpop.f32.mrb[0].mxu0
    %231 = vdwg.mxu0
    %vm232 = vcmask 64512
    %v234 = vsel %vm232, %v229, 0
    %v237 = vsel %vm232, %v75, 0
    %v240 = vsel %vm232, %v76, 0
    %v243 = vsel %vm232, %v77, 0
    %v246 = vsel %vm232, %v78, 0
    %v249 = vsel %vm232, %v79, 0
    %v252 = vsel %vm232, %v80, 0
    %v255 = vsel %vm232, %v81, 0
    %v258 = vsel %vm232, %v82, 0
    %v261 = vsel %vm232, %v83, 0
    %v264 = vsel %vm232, %v84, 0
    %v267 = vsel %vm232, %v85, 0
    %v270 = vsel %vm232, %v86, 0
    %v273 = vsel %vm232, %v87, 0
    %v276 = vsel %vm232, %v88, 0
    %v279 = vsel %vm232, %v89, 0
    %v282 = vsel %vm232, %v90, 0
    %284 = vmatprep.subr.mxu0 0.0
    %285 = vmatpush1.xpose.msra.mxu0 %v237
    %286 = vmatprep.subr.mxu0 0.0
    %287 = vmatpush1.xpose.msra.mxu0 %v240
    %288 = vmatprep.subr.mxu0 0.0
    %289 = vmatpush1.xpose.msra.mxu0 %v243
    %290 = vmatprep.subr.mxu0 0.0
    %291 = vmatpush1.xpose.msra.mxu0 %v246
    %292 = vmatprep.subr.mxu0 0.0
    %293 = vmatpush1.xpose.msra.mxu0 %v249
    %294 = vmatprep.subr.mxu0 0.0
    %295 = vmatpush1.xpose.msra.mxu0 %v252
    %296 = vmatprep.subr.mxu0 0.0
    %297 = vmatpush1.xpose.msra.mxu0 %v255
    %298 = vmatprep.subr.mxu0 0.0
    %299 = vmatpush1.xpose.msra.mxu0 %v258
    %300 = vmatprep.subr.mxu0 0.0
    %301 = vmatpush1.xpose.msra.mxu0 %v261
    %302 = vmatprep.subr.mxu0 0.0
    %303 = vmatpush1.xpose.msra.mxu0 %v264
    %304 = vmatprep.subr.mxu0 0.0
    %305 = vmatpush1.xpose.msra.mxu0 %v267
    %306 = vmatprep.subr.mxu0 0.0
    %307 = vmatpush1.xpose.msra.mxu0 %v270
    %308 = vmatprep.subr.mxu0 0.0
    %309 = vmatpush1.xpose.msra.mxu0 %v273
    %310 = vmatprep.subr.mxu0 0.0
    %311 = vmatpush1.xpose.msra.mxu0 %v276
    %312 = vmatprep.subr.mxu0 0.0
    %313 = vmatpush1.xpose.msra.mxu0 %v279
    %314 = vmatprep.subr.mxu0 0.0
    %315 = vmatpush1.xpose.msra.mxu0 %v282
    %316 = vmatprep.subr.mxu0 0.0
    %317 = vmatpush1.xpose.msra.mxu0 0.0
    %318 = vmatprep.subr.mxu0 0.0
    %319 = vmatpush1.xpose.msra.mxu0 0.0
    %320 = vmatprep.subr.mxu0 0.0
    %321 = vmatpush1.xpose.msra.mxu0 0.0
    %322 = vmatprep.subr.mxu0 0.0
    %323 = vmatpush1.xpose.msra.mxu0 0.0
    %324 = vmatprep.subr.mxu0 0.0
    %325 = vmatpush1.xpose.msra.mxu0 0.0
    %326 = vmatprep.subr.mxu0 0.0
    %327 = vmatpush1.xpose.msra.mxu0 0.0
    %328 = vmatprep.subr.mxu0 0.0
    %329 = vmatpush1.xpose.msra.mxu0 0.0
    %330 = vmatprep.subr.mxu0 0.0
    %331 = vmatpush1.xpose.msra.mxu0 0.0
    %332 = vmatprep.subr.mxu0 0.0
    %333 = vmatpush1.xpose.msra.mxu0 0.0
    %334 = vmatprep.subr.mxu0 0.0
    %335 = vmatpush1.xpose.msra.mxu0 0.0
    %336 = vmatprep.subr.mxu0 0.0
    %337 = vmatpush1.xpose.msra.mxu0 0.0
    %338 = vmatprep.subr.mxu0 0.0
    %339 = vmatpush1.xpose.msra.mxu0 0.0
    %340 = vmatprep.subr.mxu0 0.0
    %341 = vmatpush1.xpose.msra.mxu0 0.0
    %342 = vmatprep.subr.mxu0 0.0
    %343 = vmatpush1.xpose.msra.mxu0 0.0
    %344 = vmatprep.subr.mxu0 0.0
    %345 = vmatpush1.xpose.msra.mxu0 0.0
    %346 = vmatprep.subr.mxu0 0.0
    %347 = vmatpush1.xpose.msra.mxu0 0.0
    %348 = vmatprep.mubr.f32.mxu0 0.0
    %349 = vmatmul.mubr.f32.gmra.mrb[0].mxu0 %v234
    %v350 = vpop.f32.mrb[0].mxu0
    %v351 = vadd.f32 0.0, %v350
    %v352 = vpop.f32.mrb[0].mxu0
    %353 = vdwg.mxu0
    %v354 = vsub.f32 %v159, %v351
    %v356 = vlaneseq
    %v357 = vshrl.u32 %v356, 7
    %v358 = vsub.s32 0, %v357
    %v359 = vrot.slane %v91, %v358
    %v361 = vadd.f32 %v354, %v359
    %v362 = vmax.f32 %v361, 0.0
    %v363 = vld [vmem:[%s5] sm:$0xff]
    %v364 = vld [vmem:[%s5 + $0x8] sm:$0xff]
    %v365 = vld [vmem:[%s5 + $0x10] sm:$0xff]
    %v366 = vld [vmem:[%s5 + $0x18] sm:$0xff]
    %v367 = vld [vmem:[%s5 + $0x20] sm:$0xff]
    %v368 = vld [vmem:[%s5 + $0x28] sm:$0xff]
    %v369 = vld [vmem:[%s5 + $0x30] sm:$0xff]
    %v370 = vld [vmem:[%s5 + $0x38] sm:$0xff]
    %v371 = vld [vmem:[%s5 + $0x40] sm:$0xff]
    %v372 = vld [vmem:[%s5 + $0x48] sm:$0xff]
    %v373 = vld [vmem:[%s5 + $0x50] sm:$0xff]
    %v374 = vld [vmem:[%s5 + $0x58] sm:$0xff]
    %v375 = vld [vmem:[%s5 + $0x60] sm:$0xff]
    %v376 = vld [vmem:[%s5 + $0x68] sm:$0xff]
    %v377 = vld [vmem:[%s5 + $0x70] sm:$0xff]
    %v378 = vld [vmem:[%s5 + $0x78] sm:$0xff]
    %v379 = vld [vmem:[%s6] sm:$0xff]
    %v380 = vld [vmem:[%s7] sm:$0xff]
    %v381 = vld [vmem:[%s7 + $0x8] sm:$0xff]
    %v382 = vld [vmem:[%s7 + $0x10] sm:$0xff]
    %v383 = vld [vmem:[%s7 + $0x18] sm:$0xff]
    %v384 = vld [vmem:[%s7 + $0x20] sm:$0xff]
    %v385 = vld [vmem:[%s7 + $0x28] sm:$0xff]
    %v386 = vld [vmem:[%s7 + $0x30] sm:$0xff]
    %v387 = vld [vmem:[%s7 + $0x38] sm:$0xff]
    %v388 = vld [vmem:[%s7 + $0x40] sm:$0xff]
    %v389 = vld [vmem:[%s7 + $0x48] sm:$0xff]
    %v390 = vld [vmem:[%s7 + $0x50] sm:$0xff]
    %v391 = vld [vmem:[%s7 + $0x58] sm:$0xff]
    %v392 = vld [vmem:[%s7 + $0x60] sm:$0xff]
    %v393 = vld [vmem:[%s7 + $0x68] sm:$0xff]
    %v394 = vld [vmem:[%s7 + $0x70] sm:$0xff]
    %v395 = vld [vmem:[%s7 + $0x78] sm:$0xff]
    %v396 = vld [vmem:[%s8] sm:$0x1]
    %397 = vmatprep.subr.mxu0 0.0
    %398 = vmatpush1.xpose.msra.mxu0 %v363
    %399 = vmatprep.subr.mxu0 0.0
    %400 = vmatpush1.xpose.msra.mxu0 %v364
    %401 = vmatprep.subr.mxu0 0.0
    %402 = vmatpush1.xpose.msra.mxu0 %v365
    %403 = vmatprep.subr.mxu0 0.0
    %404 = vmatpush1.xpose.msra.mxu0 %v366
    %405 = vmatprep.subr.mxu0 0.0
    %406 = vmatpush1.xpose.msra.mxu0 %v367
    %407 = vmatprep.subr.mxu0 0.0
    %408 = vmatpush1.xpose.msra.mxu0 %v368
    %409 = vmatprep.subr.mxu0 0.0
    %410 = vmatpush1.xpose.msra.mxu0 %v369
    %411 = vmatprep.subr.mxu0 0.0
    %412 = vmatpush1.xpose.msra.mxu0 %v370
    %413 = vmatprep.subr.mxu0 0.0
    %414 = vmatpush1.xpose.msra.mxu0 %v371
    %415 = vmatprep.subr.mxu0 0.0
    %416 = vmatpush1.xpose.msra.mxu0 %v372
    %417 = vmatprep.subr.mxu0 0.0
    %418 = vmatpush1.xpose.msra.mxu0 %v373
    %419 = vmatprep.subr.mxu0 0.0
    %420 = vmatpush1.xpose.msra.mxu0 %v374
    %421 = vmatprep.subr.mxu0 0.0
    %422 = vmatpush1.xpose.msra.mxu0 %v375
    %423 = vmatprep.subr.mxu0 0.0
    %424 = vmatpush1.xpose.msra.mxu0 %v376
    %425 = vmatprep.subr.mxu0 0.0
    %426 = vmatpush1.xpose.msra.mxu0 %v377
    %427 = vmatprep.subr.mxu0 0.0
    %428 = vmatpush1.xpose.msra.mxu0 %v378
    %429 = vmatprep.subr.mxu0 0.0
    %430 = vmatpush1.xpose.msra.mxu0 0.0
    %431 = vmatprep.subr.mxu0 0.0
    %432 = vmatpush1.xpose.msra.mxu0 0.0
    %433 = vmatprep.subr.mxu0 0.0
    %434 = vmatpush1.xpose.msra.mxu0 0.0
    %435 = vmatprep.subr.mxu0 0.0
    %436 = vmatpush1.xpose.msra.mxu0 0.0
    %437 = vmatprep.subr.mxu0 0.0
    %438 = vmatpush1.xpose.msra.mxu0 0.0
    %439 = vmatprep.subr.mxu0 0.0
    %440 = vmatpush1.xpose.msra.mxu0 0.0
    %441 = vmatprep.subr.mxu0 0.0
    %442 = vmatpush1.xpose.msra.mxu0 0.0
    %443 = vmatprep.subr.mxu0 0.0
    %444 = vmatpush1.xpose.msra.mxu0 0.0
    %445 = vmatprep.subr.mxu0 0.0
    %446 = vmatpush1.xpose.msra.mxu0 0.0
    %447 = vmatprep.subr.mxu0 0.0
    %448 = vmatpush1.xpose.msra.mxu0 0.0
    %449 = vmatprep.subr.mxu0 0.0
    %450 = vmatpush1.xpose.msra.mxu0 0.0
    %451 = vmatprep.subr.mxu0 0.0
    %452 = vmatpush1.xpose.msra.mxu0 0.0
    %453 = vmatprep.subr.mxu0 0.0
    %454 = vmatpush1.xpose.msra.mxu0 0.0
    %455 = vmatprep.subr.mxu0 0.0
    %456 = vmatpush1.xpose.msra.mxu0 0.0
    %457 = vmatprep.subr.mxu0 0.0
    %458 = vmatpush1.xpose.msra.mxu0 0.0
    %459 = vmatprep.subr.mxu0 0.0
    %460 = vmatpush1.xpose.msra.mxu0 0.0
    %461 = vmatprep.mubr.f32.mxu0 0.0
    %462 = vmatmul.mubr.f32.gmra.mrb[0].mxu0 %v362
    %v463 = vpop.f32.mrb[0].mxu0
    %v464 = vadd.f32 0.0, %v463
    %v465 = vpop.f32.mrb[0].mxu0
    %466 = vdwg.mxu0
    %467 = vmatprep.subr.mxu0 0.0
    %468 = vmatpush1.xpose.msra.mxu0 %v379
    %469 = vmatprep.subr.mxu0 0.0
    %470 = vmatpush1.xpose.msra.mxu0 0.0
    %471 = vmatprep.subr.mxu0 0.0
    %472 = vmatpush1.xpose.msra.mxu0 0.0
    %473 = vmatprep.subr.mxu0 0.0
    %474 = vmatpush1.xpose.msra.mxu0 0.0
    %475 = vmatprep.subr.mxu0 0.0
    %476 = vmatpush1.xpose.msra.mxu0 0.0
    %477 = vmatprep.subr.mxu0 0.0
    %478 = vmatpush1.xpose.msra.mxu0 0.0
    %479 = vmatprep.subr.mxu0 0.0
    %480 = vmatpush1.xpose.msra.mxu0 0.0
    %481 = vmatprep.subr.mxu0 0.0
    %482 = vmatpush1.xpose.msra.mxu0 0.0
    %483 = vmatprep.subr.mxu0 0.0
    %484 = vmatpush1.xpose.msra.mxu0 0.0
    %485 = vmatprep.subr.mxu0 0.0
    %486 = vmatpush1.xpose.msra.mxu0 0.0
    %487 = vmatprep.subr.mxu0 0.0
    %488 = vmatpush1.xpose.msra.mxu0 0.0
    %489 = vmatprep.subr.mxu0 0.0
    %490 = vmatpush1.xpose.msra.mxu0 0.0
    %491 = vmatprep.subr.mxu0 0.0
    %492 = vmatpush1.xpose.msra.mxu0 0.0
    %493 = vmatprep.subr.mxu0 0.0
    %494 = vmatpush1.xpose.msra.mxu0 0.0
    %495 = vmatprep.subr.mxu0 0.0
    %496 = vmatpush1.xpose.msra.mxu0 0.0
    %497 = vmatprep.subr.mxu0 0.0
    %498 = vmatpush1.xpose.msra.mxu0 0.0
    %499 = vmatprep.subr.mxu0 0.0
    %500 = vmatpush1.xpose.msra.mxu0 0.0
    %501 = vmatprep.subr.mxu0 0.0
    %502 = vmatpush1.xpose.msra.mxu0 0.0
    %503 = vmatprep.subr.mxu0 0.0
    %504 = vmatpush1.xpose.msra.mxu0 0.0
    %505 = vmatprep.subr.mxu0 0.0
    %506 = vmatpush1.xpose.msra.mxu0 0.0
    %507 = vmatprep.subr.mxu0 0.0
    %508 = vmatpush1.xpose.msra.mxu0 0.0
    %509 = vmatprep.subr.mxu0 0.0
    %510 = vmatpush1.xpose.msra.mxu0 0.0
    %511 = vmatprep.subr.mxu0 0.0
    %512 = vmatpush1.xpose.msra.mxu0 0.0
    %513 = vmatprep.subr.mxu0 0.0
    %514 = vmatpush1.xpose.msra.mxu0 0.0
    %515 = vmatprep.subr.mxu0 0.0
    %516 = vmatpush1.xpose.msra.mxu0 0.0
    %517 = vmatprep.subr.mxu0 0.0
    %518 = vmatpush1.xpose.msra.mxu0 0.0
    %519 = vmatprep.subr.mxu0 0.0
    %520 = vmatpush1.xpose.msra.mxu0 0.0
    %521 = vmatprep.subr.mxu0 0.0
    %522 = vmatpush1.xpose.msra.mxu0 0.0
    %523 = vmatprep.subr.mxu0 0.0
    %524 = vmatpush1.xpose.msra.mxu0 0.0
    %525 = vmatprep.subr.mxu0 0.0
    %526 = vmatpush1.xpose.msra.mxu0 0.0
    %527 = vmatprep.subr.mxu0 0.0
    %528 = vmatpush1.xpose.msra.mxu0 0.0
    %529 = vmatprep.subr.mxu0 0.0
    %530 = vmatpush1.xpose.msra.mxu0 0.0
    %531 = vmatprep.mubr.f32.mxu0 0.0
    %532 = vmatmul.mubr.f32.gmra.mrb[0].mxu0 %v362
    %v533 = vpop.f32.mrb[0].mxu0
    %v534 = vadd.f32 0.0, %v533
    %v535 = vpop.f32.mrb[0].mxu0
    %536 = vdwg.mxu0
    %v538 = vsel %vm232, %v534, 0
    %v541 = vsel %vm232, %v380, 0
    %v544 = vsel %vm232, %v381, 0
    %v547 = vsel %vm232, %v382, 0
    %v550 = vsel %vm232, %v383, 0
    %v553 = vsel %vm232, %v384, 0
    %v556 = vsel %vm232, %v385, 0
    %v559 = vsel %vm232, %v386, 0
    %v562 = vsel %vm232, %v387, 0
    %v565 = vsel %vm232, %v388, 0
    %v568 = vsel %vm232, %v389, 0
    %v571 = vsel %vm232, %v390, 0
    %v574 = vsel %vm232, %v391, 0
    %v577 = vsel %vm232, %v392, 0
    %v580 = vsel %vm232, %v393, 0
    %v583 = vsel %vm232, %v394, 0
    %v586 = vsel %vm232, %v395, 0
    %588 = vmatprep.subr.mxu0 0.0
    %589 = vmatpush1.xpose.msra.mxu0 %v541
    %590 = vmatprep.subr.mxu0 0.0
    %591 = vmatpush1.xpose.msra.mxu0 %v544
    %592 = vmatprep.subr.mxu0 0.0
    %593 = vmatpush1.xpose.msra.mxu0 %v547
    %594 = vmatprep.subr.mxu0 0.0
    %595 = vmatpush1.xpose.msra.mxu0 %v550
    %596 = vmatprep.subr.mxu0 0.0
    %597 = vmatpush1.xpose.msra.mxu0 %v553
    %598 = vmatprep.subr.mxu0 0.0
    %599 = vmatpush1.xpose.msra.mxu0 %v556
    %600 = vmatprep.subr.mxu0 0.0
    %601 = vmatpush1.xpose.msra.mxu0 %v559
    %602 = vmatprep.subr.mxu0 0.0
    %603 = vmatpush1.xpose.msra.mxu0 %v562
    %604 = vmatprep.subr.mxu0 0.0
    %605 = vmatpush1.xpose.msra.mxu0 %v565
    %606 = vmatprep.subr.mxu0 0.0
    %607 = vmatpush1.xpose.msra.mxu0 %v568
    %608 = vmatprep.subr.mxu0 0.0
    %609 = vmatpush1.xpose.msra.mxu0 %v571
    %610 = vmatprep.subr.mxu0 0.0
    %611 = vmatpush1.xpose.msra.mxu0 %v574
    %612 = vmatprep.subr.mxu0 0.0
    %613 = vmatpush1.xpose.msra.mxu0 %v577
    %614 = vmatprep.subr.mxu0 0.0
    %615 = vmatpush1.xpose.msra.mxu0 %v580
    %616 = vmatprep.subr.mxu0 0.0
    %617 = vmatpush1.xpose.msra.mxu0 %v583
    %618 = vmatprep.subr.mxu0 0.0
    %619 = vmatpush1.xpose.msra.mxu0 %v586
    %620 = vmatprep.subr.mxu0 0.0
    %621 = vmatpush1.xpose.msra.mxu0 0.0
    %622 = vmatprep.subr.mxu0 0.0
    %623 = vmatpush1.xpose.msra.mxu0 0.0
    %624 = vmatprep.subr.mxu0 0.0
    %625 = vmatpush1.xpose.msra.mxu0 0.0
    %626 = vmatprep.subr.mxu0 0.0
    %627 = vmatpush1.xpose.msra.mxu0 0.0
    %628 = vmatprep.subr.mxu0 0.0
    %629 = vmatpush1.xpose.msra.mxu0 0.0
    %630 = vmatprep.subr.mxu0 0.0
    %631 = vmatpush1.xpose.msra.mxu0 0.0
    %632 = vmatprep.subr.mxu0 0.0
    %633 = vmatpush1.xpose.msra.mxu0 0.0
    %634 = vmatprep.subr.mxu0 0.0
    %635 = vmatpush1.xpose.msra.mxu0 0.0
    %636 = vmatprep.subr.mxu0 0.0
    %637 = vmatpush1.xpose.msra.mxu0 0.0
    %638 = vmatprep.subr.mxu0 0.0
    %639 = vmatpush1.xpose.msra.mxu0 0.0
    %640 = vmatprep.subr.mxu0 0.0
    %641 = vmatpush1.xpose.msra.mxu0 0.0
    %642 = vmatprep.subr.mxu0 0.0
    %643 = vmatpush1.xpose.msra.mxu0 0.0
    %644 = vmatprep.subr.mxu0 0.0
    %645 = vmatpush1.xpose.msra.mxu0 0.0
    %646 = vmatprep.subr.mxu0 0.0
    %647 = vmatpush1.xpose.msra.mxu0 0.0
    %648 = vmatprep.subr.mxu0 0.0
    %649 = vmatpush1.xpose.msra.mxu0 0.0
    %650 = vmatprep.subr.mxu0 0.0
    %651 = vmatpush1.xpose.msra.mxu0 0.0
    %652 = vmatprep.mubr.f32.mxu0 0.0
    %653 = vmatmul.mubr.f32.gmra.mrb[0].mxu0 %v538
    %v654 = vpop.f32.mrb[0].mxu0
    %v655 = vadd.f32 0.0, %v654
    %v656 = vpop.f32.mrb[0].mxu0
    %657 = vdwg.mxu0
    %v658 = vsub.f32 %v464, %v655
    %v660 = vlaneseq
    %v661 = vshrl.u32 %v660, 7
    %v662 = vsub.s32 0, %v661
    %v663 = vrot.slane %v396, %v662
    %v665 = vadd.f32 %v658, %v663
    %v666 = vmax.f32 %v665, 0.0
    %v667 = vld [vmem:[%s9] sm:$0xff]
    %v668 = vld [vmem:[%s9 + $0x8] sm:$0xff]
    %v669 = vld [vmem:[%s9 + $0x10] sm:$0xff]
    %v670 = vld [vmem:[%s9 + $0x18] sm:$0xff]
    %v671 = vld [vmem:[%s9 + $0x20] sm:$0xff]
    %v672 = vld [vmem:[%s9 + $0x28] sm:$0xff]
    %v673 = vld [vmem:[%s9 + $0x30] sm:$0xff]
    %v674 = vld [vmem:[%s9 + $0x38] sm:$0xff]
    %v675 = vld [vmem:[%s9 + $0x40] sm:$0xff]
    %v676 = vld [vmem:[%s9 + $0x48] sm:$0xff]
    %v677 = vld [vmem:[%s9 + $0x50] sm:$0xff]
    %v678 = vld [vmem:[%s9 + $0x58] sm:$0xff]
    %v679 = vld [vmem:[%s9 + $0x60] sm:$0xff]
    %v680 = vld [vmem:[%s9 + $0x68] sm:$0xff]
    %v681 = vld [vmem:[%s9 + $0x70] sm:$0xff]
    %v682 = vld [vmem:[%s9 + $0x78] sm:$0xff]
    %v683 = vld [vmem:[%s10] sm:$0xff]
    %v684 = vld [vmem:[%s11] sm:$0xff]
    %v685 = vld [vmem:[%s11 + $0x8] sm:$0xff]
    %v686 = vld [vmem:[%s11 + $0x10] sm:$0xff]
    %v687 = vld [vmem:[%s11 + $0x18] sm:$0xff]
    %v688 = vld [vmem:[%s11 + $0x20] sm:$0xff]
    %v689 = vld [vmem:[%s11 + $0x28] sm:$0xff]
    %v690 = vld [vmem:[%s11 + $0x30] sm:$0xff]
    %v691 = vld [vmem:[%s11 + $0x38] sm:$0xff]
    %v692 = vld [vmem:[%s11 + $0x40] sm:$0xff]
    %v693 = vld [vmem:[%s11 + $0x48] sm:$0xff]
    %v694 = vld [vmem:[%s11 + $0x50] sm:$0xff]
    %v695 = vld [vmem:[%s11 + $0x58] sm:$0xff]
    %v696 = vld [vmem:[%s11 + $0x60] sm:$0xff]
    %v697 = vld [vmem:[%s11 + $0x68] sm:$0xff]
    %v698 = vld [vmem:[%s11 + $0x70] sm:$0xff]
    %v699 = vld [vmem:[%s11 + $0x78] sm:$0xff]
    %v700 = vld [vmem:[%s12] sm:$0x1]
    %701 = vmatprep.subr.mxu0 0.0
    %702 = vmatpush1.xpose.msra.mxu0 %v667
    %703 = vmatprep.subr.mxu0 0.0
    %704 = vmatpush1.xpose.msra.mxu0 %v668
    %705 = vmatprep.subr.mxu0 0.0
    %706 = vmatpush1.xpose.msra.mxu0 %v669
    %707 = vmatprep.subr.mxu0 0.0
    %708 = vmatpush1.xpose.msra.mxu0 %v670
    %709 = vmatprep.subr.mxu0 0.0
    %710 = vmatpush1.xpose.msra.mxu0 %v671
    %711 = vmatprep.subr.mxu0 0.0
    %712 = vmatpush1.xpose.msra.mxu0 %v672
    %713 = vmatprep.subr.mxu0 0.0
    %714 = vmatpush1.xpose.msra.mxu0 %v673
    %715 = vmatprep.subr.mxu0 0.0
    %716 = vmatpush1.xpose.msra.mxu0 %v674
    %717 = vmatprep.subr.mxu0 0.0
    %718 = vmatpush1.xpose.msra.mxu0 %v675
    %719 = vmatprep.subr.mxu0 0.0
    %720 = vmatpush1.xpose.msra.mxu0 %v676
    %721 = vmatprep.subr.mxu0 0.0
    %722 = vmatpush1.xpose.msra.mxu0 %v677
    %723 = vmatprep.subr.mxu0 0.0
    %724 = vmatpush1.xpose.msra.mxu0 %v678
    %725 = vmatprep.subr.mxu0 0.0
    %726 = vmatpush1.xpose.msra.mxu0 %v679
    %727 = vmatprep.subr.mxu0 0.0
    %728 = vmatpush1.xpose.msra.mxu0 %v680
    %729 = vmatprep.subr.mxu0 0.0
    %730 = vmatpush1.xpose.msra.mxu0 %v681
    %731 = vmatprep.subr.mxu0 0.0
    %732 = vmatpush1.xpose.msra.mxu0 %v682
    %733 = vmatprep.subr.mxu0 0.0
    %734 = vmatpush1.xpose.msra.mxu0 0.0
    %735 = vmatprep.subr.mxu0 0.0
    %736 = vmatpush1.xpose.msra.mxu0 0.0
    %737 = vmatprep.subr.mxu0 0.0
    %738 = vmatpush1.xpose.msra.mxu0 0.0
    %739 = vmatprep.subr.mxu0 0.0
    %740 = vmatpush1.xpose.msra.mxu0 0.0
    %741 = vmatprep.subr.mxu0 0.0
    %742 = vmatpush1.xpose.msra.mxu0 0.0
    %743 = vmatprep.subr.mxu0 0.0
    %744 = vmatpush1.xpose.msra.mxu0 0.0
    %745 = vmatprep.subr.mxu0 0.0
    %746 = vmatpush1.xpose.msra.mxu0 0.0
    %747 = vmatprep.subr.mxu0 0.0
    %748 = vmatpush1.xpose.msra.mxu0 0.0
    %749 = vmatprep.subr.mxu0 0.0
    %750 = vmatpush1.xpose.msra.mxu0 0.0
    %751 = vmatprep.subr.mxu0 0.0
    %752 = vmatpush1.xpose.msra.mxu0 0.0
    %753 = vmatprep.subr.mxu0 0.0
    %754 = vmatpush1.xpose.msra.mxu0 0.0
    %755 = vmatprep.subr.mxu0 0.0
    %756 = vmatpush1.xpose.msra.mxu0 0.0
    %757 = vmatprep.subr.mxu0 0.0
    %758 = vmatpush1.xpose.msra.mxu0 0.0
    %759 = vmatprep.subr.mxu0 0.0
    %760 = vmatpush1.xpose.msra.mxu0 0.0
    %761 = vmatprep.subr.mxu0 0.0
    %762 = vmatpush1.xpose.msra.mxu0 0.0
    %763 = vmatprep.subr.mxu0 0.0
    %764 = vmatpush1.xpose.msra.mxu0 0.0
    %765 = vmatprep.mubr.f32.mxu0 0.0
    %766 = vmatmul.mubr.f32.gmra.mrb[0].mxu0 %v666
    %v767 = vpop.f32.mrb[0].mxu0
    %v768 = vadd.f32 0.0, %v767
    %v769 = vpop.f32.mrb[0].mxu0
    %770 = vdwg.mxu0
    %771 = vmatprep.subr.mxu0 0.0
    %772 = vmatpush1.xpose.msra.mxu0 %v683
    %773 = vmatprep.subr.mxu0 0.0
    %774 = vmatpush1.xpose.msra.mxu0 0.0
    %775 = vmatprep.subr.mxu0 0.0
    %776 = vmatpush1.xpose.msra.mxu0 0.0
    %777 = vmatprep.subr.mxu0 0.0
    %778 = vmatpush1.xpose.msra.mxu0 0.0
    %779 = vmatprep.subr.mxu0 0.0
    %780 = vmatpush1.xpose.msra.mxu0 0.0
    %781 = vmatprep.subr.mxu0 0.0
    %782 = vmatpush1.xpose.msra.mxu0 0.0
    %783 = vmatprep.subr.mxu0 0.0
    %784 = vmatpush1.xpose.msra.mxu0 0.0
    %785 = vmatprep.subr.mxu0 0.0
    %786 = vmatpush1.xpose.msra.mxu0 0.0
    %787 = vmatprep.subr.mxu0 0.0
    %788 = vmatpush1.xpose.msra.mxu0 0.0
    %789 = vmatprep.subr.mxu0 0.0
    %790 = vmatpush1.xpose.msra.mxu0 0.0
    %791 = vmatprep.subr.mxu0 0.0
    %792 = vmatpush1.xpose.msra.mxu0 0.0
    %793 = vmatprep.subr.mxu0 0.0
    %794 = vmatpush1.xpose.msra.mxu0 0.0
    %795 = vmatprep.subr.mxu0 0.0
    %796 = vmatpush1.xpose.msra.mxu0 0.0
    %797 = vmatprep.subr.mxu0 0.0
    %798 = vmatpush1.xpose.msra.mxu0 0.0
    %799 = vmatprep.subr.mxu0 0.0
    %800 = vmatpush1.xpose.msra.mxu0 0.0
    %801 = vmatprep.subr.mxu0 0.0
    %802 = vmatpush1.xpose.msra.mxu0 0.0
    %803 = vmatprep.subr.mxu0 0.0
    %804 = vmatpush1.xpose.msra.mxu0 0.0
    %805 = vmatprep.subr.mxu0 0.0
    %806 = vmatpush1.xpose.msra.mxu0 0.0
    %807 = vmatprep.subr.mxu0 0.0
    %808 = vmatpush1.xpose.msra.mxu0 0.0
    %809 = vmatprep.subr.mxu0 0.0
    %810 = vmatpush1.xpose.msra.mxu0 0.0
    %811 = vmatprep.subr.mxu0 0.0
    %812 = vmatpush1.xpose.msra.mxu0 0.0
    %813 = vmatprep.subr.mxu0 0.0
    %814 = vmatpush1.xpose.msra.mxu0 0.0
    %815 = vmatprep.subr.mxu0 0.0
    %816 = vmatpush1.xpose.msra.mxu0 0.0
    %817 = vmatprep.subr.mxu0 0.0
    %818 = vmatpush1.xpose.msra.mxu0 0.0
    %819 = vmatprep.subr.mxu0 0.0
    %820 = vmatpush1.xpose.msra.mxu0 0.0
    %821 = vmatprep.subr.mxu0 0.0
    %822 = vmatpush1.xpose.msra.mxu0 0.0
    %823 = vmatprep.subr.mxu0 0.0
    %824 = vmatpush1.xpose.msra.mxu0 0.0
    %825 = vmatprep.subr.mxu0 0.0
    %826 = vmatpush1.xpose.msra.mxu0 0.0
    %827 = vmatprep.subr.mxu0 0.0
    %828 = vmatpush1.xpose.msra.mxu0 0.0
    %829 = vmatprep.subr.mxu0 0.0
    %830 = vmatpush1.xpose.msra.mxu0 0.0
    %831 = vmatprep.subr.mxu0 0.0
    %832 = vmatpush1.xpose.msra.mxu0 0.0
    %833 = vmatprep.subr.mxu0 0.0
    %834 = vmatpush1.xpose.msra.mxu0 0.0
    %835 = vmatprep.mubr.f32.mxu0 0.0
    %836 = vmatmul.mubr.f32.gmra.mrb[0].mxu0 %v666
    %v837 = vpop.f32.mrb[0].mxu0
    %v838 = vadd.f32 0.0, %v837
    %v839 = vpop.f32.mrb[0].mxu0
    %840 = vdwg.mxu0
    %v842 = vsel %vm232, %v838, 0
    %v845 = vsel %vm232, %v684, 0
    %v848 = vsel %vm232, %v685, 0
    %v851 = vsel %vm232, %v686, 0
    %v854 = vsel %vm232, %v687, 0
    %v857 = vsel %vm232, %v688, 0
    %v860 = vsel %vm232, %v689, 0
    %v863 = vsel %vm232, %v690, 0
    %v866 = vsel %vm232, %v691, 0
    %v869 = vsel %vm232, %v692, 0
    %v872 = vsel %vm232, %v693, 0
    %v875 = vsel %vm232, %v694, 0
    %v878 = vsel %vm232, %v695, 0
    %v881 = vsel %vm232, %v696, 0
    %v884 = vsel %vm232, %v697, 0
    %v887 = vsel %vm232, %v698, 0
    %v890 = vsel %vm232, %v699, 0
    %892 = vmatprep.subr.mxu0 0.0
    %893 = vmatpush1.xpose.msra.mxu0 %v845
    %894 = vmatprep.subr.mxu0 0.0
    %895 = vmatpush1.xpose.msra.mxu0 %v848
    %896 = vmatprep.subr.mxu0 0.0
    %897 = vmatpush1.xpose.msra.mxu0 %v851
    %898 = vmatprep.subr.mxu0 0.0
    %899 = vmatpush1.xpose.msra.mxu0 %v854
    %900 = vmatprep.subr.mxu0 0.0
    %901 = vmatpush1.xpose.msra.mxu0 %v857
    %902 = vmatprep.subr.mxu0 0.0
    %903 = vmatpush1.xpose.msra.mxu0 %v860
    %904 = vmatprep.subr.mxu0 0.0
    %905 = vmatpush1.xpose.msra.mxu0 %v863
    %906 = vmatprep.subr.mxu0 0.0
    %907 = vmatpush1.xpose.msra.mxu0 %v866
    %908 = vmatprep.subr.mxu0 0.0
    %909 = vmatpush1.xpose.msra.mxu0 %v869
    %910 = vmatprep.subr.mxu0 0.0
    %911 = vmatpush1.xpose.msra.mxu0 %v872
    %912 = vmatprep.subr.mxu0 0.0
    %913 = vmatpush1.xpose.msra.mxu0 %v875
    %914 = vmatprep.subr.mxu0 0.0
    %915 = vmatpush1.xpose.msra.mxu0 %v878
    %916 = vmatprep.subr.mxu0 0.0
    %917 = vmatpush1.xpose.msra.mxu0 %v881
    %918 = vmatprep.subr.mxu0 0.0
    %919 = vmatpush1.xpose.msra.mxu0 %v884
    %920 = vmatprep.subr.mxu0 0.0
    %921 = vmatpush1.xpose.msra.mxu0 %v887
    %922 = vmatprep.subr.mxu0 0.0
    %923 = vmatpush1.xpose.msra.mxu0 %v890
    %924 = vmatprep.subr.mxu0 0.0
    %925 = vmatpush1.xpose.msra.mxu0 0.0
    %926 = vmatprep.subr.mxu0 0.0
    %927 = vmatpush1.xpose.msra.mxu0 0.0
    %928 = vmatprep.subr.mxu0 0.0
    %929 = vmatpush1.xpose.msra.mxu0 0.0
    %930 = vmatprep.subr.mxu0 0.0
    %931 = vmatpush1.xpose.msra.mxu0 0.0
    %932 = vmatprep.subr.mxu0 0.0
    %933 = vmatpush1.xpose.msra.mxu0 0.0
    %934 = vmatprep.subr.mxu0 0.0
    %935 = vmatpush1.xpose.msra.mxu0 0.0
    %936 = vmatprep.subr.mxu0 0.0
    %937 = vmatpush1.xpose.msra.mxu0 0.0
    %938 = vmatprep.subr.mxu0 0.0
    %939 = vmatpush1.xpose.msra.mxu0 0.0
    %940 = vmatprep.subr.mxu0 0.0
    %941 = vmatpush1.xpose.msra.mxu0 0.0
    %942 = vmatprep.subr.mxu0 0.0
    %943 = vmatpush1.xpose.msra.mxu0 0.0
    %944 = vmatprep.subr.mxu0 0.0
    %945 = vmatpush1.xpose.msra.mxu0 0.0
    %946 = vmatprep.subr.mxu0 0.0
    %947 = vmatpush1.xpose.msra.mxu0 0.0
    %948 = vmatprep.subr.mxu0 0.0
    %949 = vmatpush1.xpose.msra.mxu0 0.0
    %950 = vmatprep.subr.mxu0 0.0
    %951 = vmatpush1.xpose.msra.mxu0 0.0
    %952 = vmatprep.subr.mxu0 0.0
    %953 = vmatpush1.xpose.msra.mxu0 0.0
    %954 = vmatprep.subr.mxu0 0.0
    %955 = vmatpush1.xpose.msra.mxu0 0.0
    %956 = vmatprep.mubr.f32.mxu0 0.0
    %957 = vmatmul.mubr.f32.gmra.mrb[0].mxu0 %v842
    %v958 = vpop.f32.mrb[0].mxu0
    %v959 = vadd.f32 0.0, %v958
    %v960 = vpop.f32.mrb[0].mxu0
    %961 = vdwg.mxu0
    %v962 = vsub.f32 %v768, %v959
    %v964 = vlaneseq
    %v965 = vshrl.u32 %v964, 7
    %v966 = vsub.s32 0, %v965
    %v967 = vrot.slane %v700, %v966
    %v969 = vadd.f32 %v962, %v967
    %v970 = vmax.f32 %v969, 0.0
    %v971 = vld [vmem:[%s13] sm:$0xff]
    %v972 = vld [vmem:[%s13 + $0x8] sm:$0xff]
    %v973 = vld [vmem:[%s13 + $0x10] sm:$0xff]
    %v974 = vld [vmem:[%s13 + $0x18] sm:$0xff]
    %v975 = vld [vmem:[%s13 + $0x20] sm:$0xff]
    %v976 = vld [vmem:[%s13 + $0x28] sm:$0xff]
    %v977 = vld [vmem:[%s13 + $0x30] sm:$0xff]
    %v978 = vld [vmem:[%s13 + $0x38] sm:$0xff]
    %v979 = vld [vmem:[%s13 + $0x40] sm:$0xff]
    %v980 = vld [vmem:[%s13 + $0x48] sm:$0xff]
    %v981 = vld [vmem:[%s13 + $0x50] sm:$0xff]
    %v982 = vld [vmem:[%s13 + $0x58] sm:$0xff]
    %v983 = vld [vmem:[%s13 + $0x60] sm:$0xff]
    %v984 = vld [vmem:[%s13 + $0x68] sm:$0xff]
    %v985 = vld [vmem:[%s13 + $0x70] sm:$0xff]
    %v986 = vld [vmem:[%s13 + $0x78] sm:$0xff]
    %v987 = vld [vmem:[%s14] sm:$0xff]
    %v988 = vld [vmem:[%s15] sm:$0xff]
    %v989 = vld [vmem:[%s15 + $0x8] sm:$0xff]
    %v990 = vld [vmem:[%s15 + $0x10] sm:$0xff]
    %v991 = vld [vmem:[%s15 + $0x18] sm:$0xff]
    %v992 = vld [vmem:[%s15 + $0x20] sm:$0xff]
    %v993 = vld [vmem:[%s15 + $0x28] sm:$0xff]
    %v994 = vld [vmem:[%s15 + $0x30] sm:$0xff]
    %v995 = vld [vmem:[%s15 + $0x38] sm:$0xff]
    %v996 = vld [vmem:[%s15 + $0x40] sm:$0xff]
    %v997 = vld [vmem:[%s15 + $0x48] sm:$0xff]
    %v998 = vld [vmem:[%s15 + $0x50] sm:$0xff]
    %v999 = vld [vmem:[%s15 + $0x58] sm:$0xff]
    %v1000 = vld [vmem:[%s15 + $0x60] sm:$0xff]
    %v1001 = vld [vmem:[%s15 + $0x68] sm:$0xff]
    %v1002 = vld [vmem:[%s15 + $0x70] sm:$0xff]
    %v1003 = vld [vmem:[%s15 + $0x78] sm:$0xff]
    %v1004 = vld [vmem:[%s16] sm:$0x1]
    %1005 = vmatprep.subr.mxu0 0.0
    %1006 = vmatpush1.xpose.msra.mxu0 %v971
    %1007 = vmatprep.subr.mxu0 0.0
    %1008 = vmatpush1.xpose.msra.mxu0 %v972
    %1009 = vmatprep.subr.mxu0 0.0
    %1010 = vmatpush1.xpose.msra.mxu0 %v973
    %1011 = vmatprep.subr.mxu0 0.0
    %1012 = vmatpush1.xpose.msra.mxu0 %v974
    %1013 = vmatprep.subr.mxu0 0.0
    %1014 = vmatpush1.xpose.msra.mxu0 %v975
    %1015 = vmatprep.subr.mxu0 0.0
    %1016 = vmatpush1.xpose.msra.mxu0 %v976
    %1017 = vmatprep.subr.mxu0 0.0
    %1018 = vmatpush1.xpose.msra.mxu0 %v977
    %1019 = vmatprep.subr.mxu0 0.0
    %1020 = vmatpush1.xpose.msra.mxu0 %v978
    %1021 = vmatprep.subr.mxu0 0.0
    %1022 = vmatpush1.xpose.msra.mxu0 %v979
    %1023 = vmatprep.subr.mxu0 0.0
    %1024 = vmatpush1.xpose.msra.mxu0 %v980
    %1025 = vmatprep.subr.mxu0 0.0
    %1026 = vmatpush1.xpose.msra.mxu0 %v981
    %1027 = vmatprep.subr.mxu0 0.0
    %1028 = vmatpush1.xpose.msra.mxu0 %v982
    %1029 = vmatprep.subr.mxu0 0.0
    %1030 = vmatpush1.xpose.msra.mxu0 %v983
    %1031 = vmatprep.subr.mxu0 0.0
    %1032 = vmatpush1.xpose.msra.mxu0 %v984
    %1033 = vmatprep.subr.mxu0 0.0
    %1034 = vmatpush1.xpose.msra.mxu0 %v985
    %1035 = vmatprep.subr.mxu0 0.0
    %1036 = vmatpush1.xpose.msra.mxu0 %v986
    %1037 = vmatprep.subr.mxu0 0.0
    %1038 = vmatpush1.xpose.msra.mxu0 0.0
    %1039 = vmatprep.subr.mxu0 0.0
    %1040 = vmatpush1.xpose.msra.mxu0 0.0
    %1041 = vmatprep.subr.mxu0 0.0
    %1042 = vmatpush1.xpose.msra.mxu0 0.0
    %1043 = vmatprep.subr.mxu0 0.0
    %1044 = vmatpush1.xpose.msra.mxu0 0.0
    %1045 = vmatprep.subr.mxu0 0.0
    %1046 = vmatpush1.xpose.msra.mxu0 0.0
    %1047 = vmatprep.subr.mxu0 0.0
    %1048 = vmatpush1.xpose.msra.mxu0 0.0
    %1049 = vmatprep.subr.mxu0 0.0
    %1050 = vmatpush1.xpose.msra.mxu0 0.0
    %1051 = vmatprep.subr.mxu0 0.0
    %1052 = vmatpush1.xpose.msra.mxu0 0.0
    %1053 = vmatprep.subr.mxu0 0.0
    %1054 = vmatpush1.xpose.msra.mxu0 0.0
    %1055 = vmatprep.subr.mxu0 0.0
    %1056 = vmatpush1.xpose.msra.mxu0 0.0
    %1057 = vmatprep.subr.mxu0 0.0
    %1058 = vmatpush1.xpose.msra.mxu0 0.0
    %1059 = vmatprep.subr.mxu0 0.0
    %1060 = vmatpush1.xpose.msra.mxu0 0.0
    %1061 = vmatprep.subr.mxu0 0.0
    %1062 = vmatpush1.xpose.msra.mxu0 0.0
    %1063 = vmatprep.subr.mxu0 0.0
    %1064 = vmatpush1.xpose.msra.mxu0 0.0
    %1065 = vmatprep.subr.mxu0 0.0
    %1066 = vmatpush1.xpose.msra.mxu0 0.0
    %1067 = vmatprep.subr.mxu0 0.0
    %1068 = vmatpush1.xpose.msra.mxu0 0.0
    %1069 = vmatprep.mubr.f32.mxu0 0.0
    %1070 = vmatmul.mubr.f32.gmra.mrb[0].mxu0 %v970
    %v1071 = vpop.f32.mrb[0].mxu0
    %v1072 = vadd.f32 0.0, %v1071
    %v1073 = vpop.f32.mrb[0].mxu0
    %1074 = vdwg.mxu0
    %1075 = vmatprep.subr.mxu0 0.0
    %1076 = vmatpush1.xpose.msra.mxu0 %v987
    %1077 = vmatprep.subr.mxu0 0.0
    %1078 = vmatpush1.xpose.msra.mxu0 0.0
    %1079 = vmatprep.subr.mxu0 0.0
    %1080 = vmatpush1.xpose.msra.mxu0 0.0
    %1081 = vmatprep.subr.mxu0 0.0
    %1082 = vmatpush1.xpose.msra.mxu0 0.0
    %1083 = vmatprep.subr.mxu0 0.0
    %1084 = vmatpush1.xpose.msra.mxu0 0.0
    %1085 = vmatprep.subr.mxu0 0.0
    %1086 = vmatpush1.xpose.msra.mxu0 0.0
    %1087 = vmatprep.subr.mxu0 0.0
    %1088 = vmatpush1.xpose.msra.mxu0 0.0
    %1089 = vmatprep.subr.mxu0 0.0
    %1090 = vmatpush1.xpose.msra.mxu0 0.0
    %1091 = vmatprep.subr.mxu0 0.0
    %1092 = vmatpush1.xpose.msra.mxu0 0.0
    %1093 = vmatprep.subr.mxu0 0.0
    %1094 = vmatpush1.xpose.msra.mxu0 0.0
    %1095 = vmatprep.subr.mxu0 0.0
    %1096 = vmatpush1.xpose.msra.mxu0 0.0
    %1097 = vmatprep.subr.mxu0 0.0
    %1098 = vmatpush1.xpose.msra.mxu0 0.0
    %1099 = vmatprep.subr.mxu0 0.0
    %1100 = vmatpush1.xpose.msra.mxu0 0.0
    %1101 = vmatprep.subr.mxu0 0.0
    %1102 = vmatpush1.xpose.msra.mxu0 0.0
    %1103 = vmatprep.subr.mxu0 0.0
    %1104 = vmatpush1.xpose.msra.mxu0 0.0
    %1105 = vmatprep.subr.mxu0 0.0
    %1106 = vmatpush1.xpose.msra.mxu0 0.0
    %1107 = vmatprep.subr.mxu0 0.0
    %1108 = vmatpush1.xpose.msra.mxu0 0.0
    %1109 = vmatprep.subr.mxu0 0.0
    %1110 = vmatpush1.xpose.msra.mxu0 0.0
    %1111 = vmatprep.subr.mxu0 0.0
    %1112 = vmatpush1.xpose.msra.mxu0 0.0
    %1113 = vmatprep.subr.mxu0 0.0
    %1114 = vmatpush1.xpose.msra.mxu0 0.0
    %1115 = vmatprep.subr.mxu0 0.0
    %1116 = vmatpush1.xpose.msra.mxu0 0.0
    %1117 = vmatprep.subr.mxu0 0.0
    %1118 = vmatpush1.xpose.msra.mxu0 0.0
    %1119 = vmatprep.subr.mxu0 0.0
    %1120 = vmatpush1.xpose.msra.mxu0 0.0
    %1121 = vmatprep.subr.mxu0 0.0
    %1122 = vmatpush1.xpose.msra.mxu0 0.0
    %1123 = vmatprep.subr.mxu0 0.0
    %1124 = vmatpush1.xpose.msra.mxu0 0.0
    %1125 = vmatprep.subr.mxu0 0.0
    %1126 = vmatpush1.xpose.msra.mxu0 0.0
    %1127 = vmatprep.subr.mxu0 0.0
    %1128 = vmatpush1.xpose.msra.mxu0 0.0
    %1129 = vmatprep.subr.mxu0 0.0
    %1130 = vmatpush1.xpose.msra.mxu0 0.0
    %1131 = vmatprep.subr.mxu0 0.0
    %1132 = vmatpush1.xpose.msra.mxu0 0.0
    %1133 = vmatprep.subr.mxu0 0.0
    %1134 = vmatpush1.xpose.msra.mxu0 0.0
    %1135 = vmatprep.subr.mxu0 0.0
    %1136 = vmatpush1.xpose.msra.mxu0 0.0
    %1137 = vmatprep.subr.mxu0 0.0
    %1138 = vmatpush1.xpose.msra.mxu0 0.0
    %1139 = vmatprep.mubr.f32.mxu0 0.0
    %1140 = vmatmul.mubr.f32.gmra.mrb[0].mxu0 %v970
    %v1141 = vpop.f32.mrb[0].mxu0
    %v1142 = vadd.f32 0.0, %v1141
    %v1143 = vpop.f32.mrb[0].mxu0
    %1144 = vdwg.mxu0
    %v1146 = vsel %vm232, %v1142, 0
    %v1149 = vsel %vm232, %v988, 0
    %v1152 = vsel %vm232, %v989, 0
    %v1155 = vsel %vm232, %v990, 0
    %v1158 = vsel %vm232, %v991, 0
    %v1161 = vsel %vm232, %v992, 0
    %v1164 = vsel %vm232, %v993, 0
    %v1167 = vsel %vm232, %v994, 0
    %v1170 = vsel %vm232, %v995, 0
    %v1173 = vsel %vm232, %v996, 0
    %v1176 = vsel %vm232, %v997, 0
    %v1179 = vsel %vm232, %v998, 0
    %v1182 = vsel %vm232, %v999, 0
    %v1185 = vsel %vm232, %v1000, 0
    %v1188 = vsel %vm232, %v1001, 0
    %v1191 = vsel %vm232, %v1002, 0
    %v1194 = vsel %vm232, %v1003, 0
    %1196 = vmatprep.subr.mxu0 0.0
    %1197 = vmatpush1.xpose.msra.mxu0 %v1149
    %1198 = vmatprep.subr.mxu0 0.0
    %1199 = vmatpush1.xpose.msra.mxu0 %v1152
    %1200 = vmatprep.subr.mxu0 0.0
    %1201 = vmatpush1.xpose.msra.mxu0 %v1155
    %1202 = vmatprep.subr.mxu0 0.0
    %1203 = vmatpush1.xpose.msra.mxu0 %v1158
    %1204 = vmatprep.subr.mxu0 0.0
    %1205 = vmatpush1.xpose.msra.mxu0 %v1161
    %1206 = vmatprep.subr.mxu0 0.0
    %1207 = vmatpush1.xpose.msra.mxu0 %v1164
    %1208 = vmatprep.subr.mxu0 0.0
    %1209 = vmatpush1.xpose.msra.mxu0 %v1167
    %1210 = vmatprep.subr.mxu0 0.0
    %1211 = vmatpush1.xpose.msra.mxu0 %v1170
    %1212 = vmatprep.subr.mxu0 0.0
    %1213 = vmatpush1.xpose.msra.mxu0 %v1173
    %1214 = vmatprep.subr.mxu0 0.0
    %1215 = vmatpush1.xpose.msra.mxu0 %v1176
    %1216 = vmatprep.subr.mxu0 0.0
    %1217 = vmatpush1.xpose.msra.mxu0 %v1179
    %1218 = vmatprep.subr.mxu0 0.0
    %1219 = vmatpush1.xpose.msra.mxu0 %v1182
    %1220 = vmatprep.subr.mxu0 0.0
    %1221 = vmatpush1.xpose.msra.mxu0 %v1185
    %1222 = vmatprep.subr.mxu0 0.0
    %1223 = vmatpush1.xpose.msra.mxu0 %v1188
    %1224 = vmatprep.subr.mxu0 0.0
    %1225 = vmatpush1.xpose.msra.mxu0 %v1191
    %1226 = vmatprep.subr.mxu0 0.0
    %1227 = vmatpush1.xpose.msra.mxu0 %v1194
    %1228 = vmatprep.subr.mxu0 0.0
    %1229 = vmatpush1.xpose.msra.mxu0 0.0
    %1230 = vmatprep.subr.mxu0 0.0
    %1231 = vmatpush1.xpose.msra.mxu0 0.0
    %1232 = vmatprep.subr.mxu0 0.0
    %1233 = vmatpush1.xpose.msra.mxu0 0.0
    %1234 = vmatprep.subr.mxu0 0.0
    %1235 = vmatpush1.xpose.msra.mxu0 0.0
    %1236 = vmatprep.subr.mxu0 0.0
    %1237 = vmatpush1.xpose.msra.mxu0 0.0
    %1238 = vmatprep.subr.mxu0 0.0
    %1239 = vmatpush1.xpose.msra.mxu0 0.0
    %1240 = vmatprep.subr.mxu0 0.0
    %1241 = vmatpush1.xpose.msra.mxu0 0.0
    %1242 = vmatprep.subr.mxu0 0.0
    %1243 = vmatpush1.xpose.msra.mxu0 0.0
    %1244 = vmatprep.subr.mxu0 0.0
    %1245 = vmatpush1.xpose.msra.mxu0 0.0
    %1246 = vmatprep.subr.mxu0 0.0
    %1247 = vmatpush1.xpose.msra.mxu0 0.0
    %1248 = vmatprep.subr.mxu0 0.0
    %1249 = vmatpush1.xpose.msra.mxu0 0.0
    %1250 = vmatprep.subr.mxu0 0.0
    %1251 = vmatpush1.xpose.msra.mxu0 0.0
    %1252 = vmatprep.subr.mxu0 0.0
    %1253 = vmatpush1.xpose.msra.mxu0 0.0
    %1254 = vmatprep.subr.mxu0 0.0
    %1255 = vmatpush1.xpose.msra.mxu0 0.0
    %1256 = vmatprep.subr.mxu0 0.0
    %1257 = vmatpush1.xpose.msra.mxu0 0.0
    %1258 = vmatprep.subr.mxu0 0.0
    %1259 = vmatpush1.xpose.msra.mxu0 0.0
    %1260 = vmatprep.mubr.f32.mxu0 0.0
    %1261 = vmatmul.mubr.f32.gmra.mrb[0].mxu0 %v1146
    %v1262 = vpop.f32.mrb[0].mxu0
    %v1263 = vadd.f32 0.0, %v1262
    %v1264 = vpop.f32.mrb[0].mxu0
    %1265 = vdwg.mxu0
    %v1266 = vsub.f32 %v1072, %v1263
    %v1268 = vlaneseq
    %v1269 = vshrl.u32 %v1268, 7
    %v1270 = vsub.s32 0, %v1269
    %v1271 = vrot.slane %v1004, %v1270
    %v1273 = vadd.f32 %v1266, %v1271
    %1274 = vst [vmem:[#allocation2] sm:$0xff] %v1273
    // Predicated region
    $region70: #{eidensenet_forward.1} parent=1 // pred_check
      _
    $region71: #{eidensenet_forward.1} parent=1 // pred_check_branch
      %1276 = sbr.rel (0) target = $region73
    $region72: #{eidensenet_forward.1} parent=1 // pred_region
      %s1278 = ssub.s32 128, 128
      %1279 = vsyncadd [#allocation3], %s1278
      %s1281 = sshll.u32 [#allocation2], 4
      %s1282 = int_to_ptr.vmem [resolvable:$true] %s1281
      %1284 = dma.vmem_to_hbm [thread:$0]  %s1282, 128, %s17, [#allocation3]
    $region73: #{eidensenet_forward.1} parent=1 // pred_fallthru
      _
    // Predicated region
    $region74: #{eidensenet_forward.1} parent=1 // pred_check
      _
    $region75: #{eidensenet_forward.1} parent=1 // pred_check_branch
      %1286 = sbr.rel (0) target = $region77
    $region76: #{eidensenet_forward.1} parent=1 // pred_region
      %1287 = dma.done [#allocation3], 128
    $region77: #{eidensenet_forward.1} parent=1 // pred_fallthru
      _
    %1288 = vsyncpa [#allocation3], 1

</llo_original>
